<compile_context>
chip_gen: v7x
topology: tpu7x:2x2x1
jax: 0.10.0
libtpu: 0.0.40
codegen_flags: <defaults>
</compile_context>

<pallas_src>
import math

import jax
import jax.numpy as jnp
from jax import lax
from jax.experimental import pallas as pl
from jax.experimental.pallas import tpu as pltpu

_NEG = -1.0e30        # sentinel: "masked out / no positive seen yet"
_NEG_GATE = -1.0e29   # anything above this is a real distance
_LANE = 128


def _round_up(a, b):
    return (a + b - 1) // b * b


def _triplet_tile_kernel(xr_ref, xc_ref, tr_ref, tc_ref, sqr_ref, sqc_ref,
                         ir_ref, ic_ref, out_ref,
                         pmax, pden, pnum, nden, nnum):
    k = pl.program_id(1)          # column-block index ('arbitrary' reduction)

    @pl.when(k == 0)
    def _init():
        pmax[...] = jnp.full_like(pmax, _NEG)
        pden[...] = jnp.zeros_like(pden)
        pnum[...] = jnp.zeros_like(pnum)
        nden[...] = jnp.zeros_like(nden)
        nnum[...] = jnp.zeros_like(nnum)

    bn = xc_ref.shape[0]
    nblk = bn // _LANE

    # One MXU contraction per tile; contracting dim 1 of both operands avoids
    # an explicit transpose of the (bn, d) column tile.
    gram = lax.dot_general(xr_ref[...], xc_ref[...],
                           dimension_numbers=(((1,), (1,)), ((), ())),
                           preferred_element_type=jnp.float32)       # (bm, bn)
    d2 = sqr_ref[...] + sqc_ref[...] - 2.0 * gram
    dist = jnp.sqrt(jnp.maximum(d2, 0.0))

    # Masking: labels + global indices arrive row-(bm,1) and col-(1,bn)
    # oriented, so this is two broadcast compares and one AND — no iotas, no
    # transposes. Padded columns have label -1 (never a positive) and a huge
    # squared norm (exp(-dist) underflows to exactly 0 on the negative branch).
    same = tr_ref[...] == tc_ref[...]
    mask_pos = jnp.logical_and(same, ir_ref[...] != ic_ref[...])

    # f32 "masked distance" carriers so the lane-block loop never slices bools.
    dpos = jnp.where(mask_pos, dist, _NEG)
    dneg = jnp.where(same, _NEG, dist)

    # --- positive branch: per-lane online max (cross-lane reduce deferred) ---
    blk_max = dpos[:, 0:_LANE]
    for c in range(1, nblk):
        blk_max = jnp.maximum(blk_max, dpos[:, c * _LANE:(c + 1) * _LANE])

    m_old = pmax[...]
    m_new = jnp.maximum(m_old, blk_max)
    m_old_s = jnp.where(m_old > _NEG_GATE, m_old, 0.0)
    m_new_s = jnp.where(m_new > _NEG_GATE, m_new, 0.0)
    alpha = jnp.exp(m_old_s - m_new_s)           # (bm,128): no lane broadcast
    pmax[...] = m_new

    # --- lane-dense running sums: plain VPU adds/FMAs per 128-lane block -----
    pden_acc = alpha * pden[...]
    pnum_acc = alpha * pnum[...]
    nden_acc = nden[...]
    nnum_acc = nnum[...]
    for c in range(nblk):
        sl = slice(c * _LANE, (c + 1) * _LANE)
        dp = dpos[:, sl]
        dn = dneg[:, sl]
        ep = jnp.where(dp > _NEG_GATE, jnp.exp(dp - m_new_s), 0.0)
        en = jnp.where(dn > _NEG_GATE, jnp.exp(-dn), 0.0)
        pden_acc = pden_acc + ep
        pnum_acc = pnum_acc + dp * ep
        nden_acc = nden_acc + en
        nnum_acc = nnum_acc + dn * en
    pden[...] = pden_acc
    pnum[...] = pnum_acc
    nden[...] = nden_acc
    nnum[...] = nnum_acc

    # --- finalize: one cross-lane XLU reduction per accumulator per row block.
    @pl.when(k == pl.num_programs(1) - 1)
    def _finalize():
        m_lane = pmax[...]                                        # (bm, 128)
        m_lane_s = jnp.where(m_lane > _NEG_GATE, m_lane, 0.0)
        m_row = jnp.max(m_lane, axis=1, keepdims=True)            # (bm, 1)
        m_row_s = jnp.where(m_row > _NEG_GATE, m_row, 0.0)
        scale = jnp.exp(m_lane_s - m_row_s)                       # <= 1
        den_p = jnp.sum(scale * pden[...], axis=1, keepdims=True)
        num_p = jnp.sum(scale * pnum[...], axis=1, keepdims=True)
        den_n = jnp.sum(nden[...], axis=1, keepdims=True)
        num_n = jnp.sum(nnum[...], axis=1, keepdims=True)
        diff = num_p / den_p - num_n / den_n
        out_ref[...] = jnp.logaddexp(jnp.zeros_like(diff), diff)  # softplus


def triplet_loss_soft_margin_weighted(inputs, targets, *, bm=256, bn=1024):
    """inputs: (N, D) float (f32/bf16); targets: (N,) int labels -> scalar f32."""
    n, d = inputs.shape

    # Tile sizing: bn must be a multiple of 128 (lane blocks), bm a multiple of
    # 128 keeps the MXU happy; shrink both for small batches.
    bm = max(_LANE, _round_up(bm, _LANE))
    bn = max(_LANE, _round_up(bn, _LANE))
    n_pad = _round_up(n, _LANE)
    bm = min(bm, n_pad)
    bn = min(bn, n_pad)
    n_pad = _round_up(n_pad, (bm * bn) // math.gcd(bm, bn))

    x = inputs
    t = targets.reshape(-1).astype(jnp.int32)
    if n_pad != n:
        x = jnp.pad(x, ((0, n_pad - n), (0, 0)))
        t = jnp.pad(t, (0, n_pad - n), constant_values=-1)

    sq = jnp.sum(jnp.square(x.astype(jnp.float32)), axis=1)       # ||x_i||^2
    idx = jnp.arange(n_pad, dtype=jnp.int32)
    # Padded columns get a huge squared norm -> dist >= 1000 -> exp(-dist) == 0,
    # so no per-tile "valid column" mask is needed.
    sq_col = jnp.where(idx < n, sq, 1.0e6)

    grid = (n_pad // bm, n_pad // bn)

    itemsize = jnp.dtype(x.dtype).itemsize
    vmem_need = (2 * itemsize * d * (bm + bn)      # double-buffered embedding tiles
                 + 5 * bm * _LANE * 4              # lane-dense accumulators
                 + 2 * 4 * 3 * (bm + bn)           # labels / norms / indices
                 + 2 * 4 * bm)                     # output block
    vmem_limit = int(min(max(2 * vmem_need, 32 * 1024 * 1024), 64 * 1024 * 1024))

    per_row = pl.pallas_call(
        _triplet_tile_kernel,
        out_shape=jax.ShapeDtypeStruct((n_pad, 1), jnp.float32),
        grid=grid,
        in_specs=[
            pl.BlockSpec((bm, d), lambda i, k: (i, 0)),   # row embeddings
            pl.BlockSpec((bn, d), lambda i, k: (k, 0)),   # col embeddings
            pl.BlockSpec((bm, 1), lambda i, k: (i, 0)),   # row labels
            pl.BlockSpec((1, bn), lambda i, k: (0, k)),   # col labels (lane axis)
            pl.BlockSpec((bm, 1), lambda i, k: (i, 0)),   # row ||x||^2
            pl.BlockSpec((1, bn), lambda i, k: (0, k)),   # col ||x||^2 (lane axis)
            pl.BlockSpec((bm, 1), lambda i, k: (i, 0)),   # row global index
            pl.BlockSpec((1, bn), lambda i, k: (0, k)),   # col global index
        ],
        out_specs=pl.BlockSpec((bm, 1), lambda i, k: (i, 0)),
        scratch_shapes=[pltpu.VMEM((bm, _LANE), jnp.float32)] * 5,
        compiler_params=pltpu.CompilerParams(
            dimension_semantics=("parallel", "arbitrary"),
            vmem_limit_bytes=vmem_limit),
    )(x, x, t.reshape(n_pad, 1), t.reshape(1, n_pad),
      sq.reshape(n_pad, 1), sq_col.reshape(1, n_pad),
      idx.reshape(n_pad, 1), idx.reshape(1, n_pad))
    return jnp.mean(per_row[:n, 0])


def _reference(inputs, targets):
    """Pure-JAX mirror of the PyTorch forward (margin='soft', sample='weighted')."""
    x = inputs.astype(jnp.float32)
    n = x.shape[0]
    dist = jnp.sqrt(jnp.sum((x[:, None, :] - x[None, :, :]) ** 2, axis=2))
    same = targets[:, None] == targets[None, :]
    mask_pos = jnp.logical_and(same, ~jnp.eye(n, dtype=bool)).astype(jnp.float32)
    mask_neg = (~same).astype(jnp.float32)
    ep = jnp.exp(dist) * mask_pos
    wp = ep / jnp.sum(ep, axis=1, keepdims=True)
    dist_p = jnp.sum(dist * mask_pos * wp, axis=1)
    en = jnp.exp(-dist) * mask_neg
    wn = en / jnp.sum(en, axis=1, keepdims=True)
    dist_n = jnp.sum(dist * mask_neg * wn, axis=1)
    return jnp.mean(jax.nn.softplus(dist_p - dist_n))


if __name__ == "__main__":
    key = jax.random.PRNGKey(0)
    k1, k2 = jax.random.split(key)

    TOL = 2e-3   # exact exp on the negative branch now (no approx reciprocal)

    # Case 1: small single-tile path (toy shapes consistent with the module).
    x1 = jax.random.normal(k1, (8, 32), dtype=jnp.float32)
    t1 = jnp.array([0, 0, 1, 1, 2, 2, 3, 3], dtype=jnp.int32)
    loss1 = triplet_loss_soft_margin_weighted(x1, t1)
    jax.block_until_ready(loss1)
    ref1 = _reference(x1, t1)
    assert jnp.allclose(loss1, ref1, rtol=TOL, atol=TOL), (loss1, ref1)

    # Case 2: multi-tile path (padding, diag tiles, k-axis online accumulation).
    x2 = jax.random.normal(k2, (192, 64), dtype=jnp.float32)
    t2 = jnp.arange(192, dtype=jnp.int32) % 8
    loss2 = triplet_loss_soft_margin_weighted(x2, t2, bm=128, bn=128)
    jax.block_until_ready(loss2)
    ref2 = _reference(x2, t2)
    assert jnp.allclose(loss2, ref2, rtol=TOL, atol=TOL), (loss2, ref2)

    print("KERNEL_OK")
</pallas_src>

<mosaic_0001>
module attributes {stable_mosaic.version = 11 : i64} {
  func.func @_triplet_tile_kernel(%arg0: i32, %arg1: i32, %arg2: memref<128x32xf32, #tpu.memory_space<vmem>>, %arg3: memref<128x32xf32, #tpu.memory_space<vmem>>, %arg4: memref<128x1xi32, #tpu.memory_space<vmem>>, %arg5: memref<1x128xi32, #tpu.memory_space<vmem>>, %arg6: memref<128x1xf32, #tpu.memory_space<vmem>>, %arg7: memref<1x128xf32, #tpu.memory_space<vmem>>, %arg8: memref<128x1xi32, #tpu.memory_space<vmem>>, %arg9: memref<1x128xi32, #tpu.memory_space<vmem>>, %arg10: memref<128x1xf32, #tpu.memory_space<vmem>>, %arg11: memref<128x128xf32, #tpu.memory_space<vmem>>, %arg12: memref<128x128xf32, #tpu.memory_space<vmem>>, %arg13: memref<128x128xf32, #tpu.memory_space<vmem>>, %arg14: memref<128x128xf32, #tpu.memory_space<vmem>>, %arg15: memref<128x128xf32, #tpu.memory_space<vmem>>) attributes {dimension_semantics = [#tpu.dimension_semantics<parallel>, #tpu.dimension_semantics<arbitrary>], iteration_bounds = array<i64: 1, 1>, scalar_prefetch = 0 : i64, scratch_operands = 5 : i64, tpu.core_type = #tpu.core_type<tc>, window_params = [{transform_indices = @transform_0, window_bounds = array<i64: 128, 32>}, {transform_indices = @transform_1, window_bounds = array<i64: 128, 32>}, {transform_indices = @transform_2, window_bounds = array<i64: 128, 1>}, {transform_indices = @transform_3, window_bounds = array<i64: 1, 128>}, {transform_indices = @transform_4, window_bounds = array<i64: 128, 1>}, {transform_indices = @transform_5, window_bounds = array<i64: 1, 128>}, {transform_indices = @transform_6, window_bounds = array<i64: 128, 1>}, {transform_indices = @transform_7, window_bounds = array<i64: 1, 128>}, {transform_indices = @transform_8, window_bounds = array<i64: 128, 1>}]} {
    %c0_i32 = arith.constant 0 : i32
    %0 = arith.cmpi eq, %arg1, %c0_i32 : i32
    %1 = arith.extui %0 : i1 to i32
    %c0_i32_0 = arith.constant 0 : i32
    %2 = arith.cmpi ne, %1, %c0_i32_0 : i32
    scf.if %2 {
      %cst_51 = arith.constant -1.000000e+30 : f32
      %77 = vector.broadcast %cst_51 : f32 to vector<128x128xf32>
      %c0_52 = arith.constant 0 : index
      %c0_53 = arith.constant 0 : index
      %78 = vector.load %arg11[%c0_52, %c0_53] : memref<128x128xf32, #tpu.memory_space<vmem>>, vector<128x128xf32>
      tpu.vector_store %arg11[%c0_52, %c0_53], %77 {strides = array<i32>} : memref<128x128xf32, #tpu.memory_space<vmem>>, vector<128x128xf32>,
      %cst_54 = arith.constant 0.000000e+00 : f32
      %79 = vector.broadcast %cst_54 : f32 to vector<128x128xf32>
      %c0_55 = arith.constant 0 : index
      %c0_56 = arith.constant 0 : index
      %80 = vector.load %arg12[%c0_55, %c0_56] : memref<128x128xf32, #tpu.memory_space<vmem>>, vector<128x128xf32>
      tpu.vector_store %arg12[%c0_55, %c0_56], %79 {strides = array<i32>} : memref<128x128xf32, #tpu.memory_space<vmem>>, vector<128x128xf32>,
      %cst_57 = arith.constant 0.000000e+00 : f32
      %81 = vector.broadcast %cst_57 : f32 to vector<128x128xf32>
      %c0_58 = arith.constant 0 : index
      %c0_59 = arith.constant 0 : index
      %82 = vector.load %arg13[%c0_58, %c0_59] : memref<128x128xf32, #tpu.memory_space<vmem>>, vector<128x128xf32>
      tpu.vector_store %arg13[%c0_58, %c0_59], %81 {strides = array<i32>} : memref<128x128xf32, #tpu.memory_space<vmem>>, vector<128x128xf32>,
      %cst_60 = arith.constant 0.000000e+00 : f32
      %83 = vector.broadcast %cst_60 : f32 to vector<128x128xf32>
      %c0_61 = arith.constant 0 : index
      %c0_62 = arith.constant 0 : index
      %84 = vector.load %arg14[%c0_61, %c0_62] : memref<128x128xf32, #tpu.memory_space<vmem>>, vector<128x128xf32>
      tpu.vector_store %arg14[%c0_61, %c0_62], %83 {strides = array<i32>} : memref<128x128xf32, #tpu.memory_space<vmem>>, vector<128x128xf32>,
      %cst_63 = arith.constant 0.000000e+00 : f32
      %85 = vector.broadcast %cst_63 : f32 to vector<128x128xf32>
      %c0_64 = arith.constant 0 : index
      %c0_65 = arith.constant 0 : index
      %86 = vector.load %arg15[%c0_64, %c0_65] : memref<128x128xf32, #tpu.memory_space<vmem>>, vector<128x128xf32>
      tpu.vector_store %arg15[%c0_64, %c0_65], %85 {strides = array<i32>} : memref<128x128xf32, #tpu.memory_space<vmem>>, vector<128x128xf32>,
    } else {
    }
    %c0 = arith.constant 0 : index
    %c0_1 = arith.constant 0 : index
    %3 = vector.load %arg2[%c0, %c0_1] : memref<128x32xf32, #tpu.memory_space<vmem>>, vector<128x32xf32>
    %c0_2 = arith.constant 0 : index
    %c0_3 = arith.constant 0 : index
    %4 = vector.load %arg3[%c0_2, %c0_3] : memref<128x32xf32, #tpu.memory_space<vmem>>, vector<128x32xf32>
    %cst = arith.constant dense<0.000000e+00> : vector<128x128xf32>
    %5 = tpu.matmul %3, %4, %cst {dimension_numbers = #tpu.dot_dimension_numbers<[1], [1], [0], [0], [0, 0, 1, 0], [], []>} : vector<128x32xf32>, vector<128x32xf32>, vector<128x128xf32> -> vector<128x128xf32>
    %c0_4 = arith.constant 0 : index
    %c0_5 = arith.constant 0 : index
    %6 = vector.load %arg6[%c0_4, %c0_5] : memref<128x1xf32, #tpu.memory_space<vmem>>, vector<128x1xf32>
    %c0_6 = arith.constant 0 : index
    %c0_7 = arith.constant 0 : index
    %7 = vector.load %arg7[%c0_6, %c0_7] : memref<1x128xf32, #tpu.memory_space<vmem>>, vector<1x128xf32>
    %8 = vector.broadcast %6 : vector<128x1xf32> to vector<128x128xf32>
    %9 = vector.broadcast %7 : vector<1x128xf32> to vector<128x128xf32>
    %10 = arith.addf %8, %9 : vector<128x128xf32>
    %cst_8 = arith.constant 2.000000e+00 : f32
    %11 = vector.broadcast %cst_8 : f32 to vector<128x128xf32>
    %12 = arith.mulf %11, %5 : vector<128x128xf32>
    %13 = arith.subf %10, %12 : vector<128x128xf32>
    %cst_9 = arith.constant 0.000000e+00 : f32
    %14 = vector.broadcast %cst_9 : f32 to vector<128x128xf32>
    %15 = arith.maximumf %13, %14 : vector<128x128xf32>
    %16 = math.sqrt %15 : vector<128x128xf32>
    %c0_10 = arith.constant 0 : index
    %c0_11 = arith.constant 0 : index
    %17 = vector.load %arg4[%c0_10, %c0_11] : memref<128x1xi32, #tpu.memory_space<vmem>>, vector<128x1xi32>
    %c0_12 = arith.constant 0 : index
    %c0_13 = arith.constant 0 : index
    %18 = vector.load %arg5[%c0_12, %c0_13] : memref<1x128xi32, #tpu.memory_space<vmem>>, vector<1x128xi32>
    %19 = vector.broadcast %17 : vector<128x1xi32> to vector<128x128xi32>
    %20 = vector.broadcast %18 : vector<1x128xi32> to vector<128x128xi32>
    %21 = arith.cmpi eq, %19, %20 : vector<128x128xi32>
    %c0_14 = arith.constant 0 : index
    %c0_15 = arith.constant 0 : index
    %22 = vector.load %arg8[%c0_14, %c0_15] : memref<128x1xi32, #tpu.memory_space<vmem>>, vector<128x1xi32>
    %c0_16 = arith.constant 0 : index
    %c0_17 = arith.constant 0 : index
    %23 = vector.load %arg9[%c0_16, %c0_17] : memref<1x128xi32, #tpu.memory_space<vmem>>, vector<1x128xi32>
    %24 = vector.broadcast %22 : vector<128x1xi32> to vector<128x128xi32>
    %25 = vector.broadcast %23 : vector<1x128xi32> to vector<128x128xi32>
    %26 = arith.cmpi ne, %24, %25 : vector<128x128xi32>
    %27 = arith.andi %21, %26 : vector<128x128xi1>
    %cst_18 = arith.constant -1.000000e+30 : f32
    %28 = vector.broadcast %cst_18 : f32 to vector<128x128xf32>
    %29 = arith.select %27, %16, %28 : vector<128x128xi1>, vector<128x128xf32>
    %cst_19 = arith.constant -1.000000e+30 : f32
    %30 = vector.broadcast %cst_19 : f32 to vector<128x128xf32>
    %31 = arith.select %21, %30, %16 : vector<128x128xi1>, vector<128x128xf32>
    %c0_20 = arith.constant 0 : index
    %c0_21 = arith.constant 0 : index
    %32 = vector.load %arg11[%c0_20, %c0_21] : memref<128x128xf32, #tpu.memory_space<vmem>>, vector<128x128xf32>
    %33 = arith.maximumf %32, %29 : vector<128x128xf32>
    %cst_22 = arith.constant -1.000000e+29 : f32
    %34 = vector.broadcast %cst_22 : f32 to vector<128x128xf32>
    %35 = arith.cmpf ogt, %32, %34 : vector<128x128xf32>
    %cst_23 = arith.constant 0.000000e+00 : f32
    %36 = vector.broadcast %cst_23 : f32 to vector<128x128xf32>
    %37 = arith.select %35, %32, %36 : vector<128x128xi1>, vector<128x128xf32>
    %cst_24 = arith.constant -1.000000e+29 : f32
    %38 = vector.broadcast %cst_24 : f32 to vector<128x128xf32>
    %39 = arith.cmpf ogt, %33, %38 : vector<128x128xf32>
    %cst_25 = arith.constant 0.000000e+00 : f32
    %40 = vector.broadcast %cst_25 : f32 to vector<128x128xf32>
    %41 = arith.select %39, %33, %40 : vector<128x128xi1>, vector<128x128xf32>
    %42 = arith.subf %37, %41 : vector<128x128xf32>
    %43 = math.exp %42 : vector<128x128xf32>
    %c0_26 = arith.constant 0 : index
    %c0_27 = arith.constant 0 : index
    %44 = vector.load %arg11[%c0_26, %c0_27] : memref<128x128xf32, #tpu.memory_space<vmem>>, vector<128x128xf32>
    tpu.vector_store %arg11[%c0_26, %c0_27], %33 {strides = array<i32>} : memref<128x128xf32, #tpu.memory_space<vmem>>, vector<128x128xf32>,
    %c0_28 = arith.constant 0 : index
    %c0_29 = arith.constant 0 : index
    %45 = vector.load %arg12[%c0_28, %c0_29] : memref<128x128xf32, #tpu.memory_space<vmem>>, vector<128x128xf32>
    %46 = arith.mulf %43, %45 : vector<128x128xf32>
    %c0_30 = arith.constant 0 : index
    %c0_31 = arith.constant 0 : index
    %47 = vector.load %arg13[%c0_30, %c0_31] : memref<128x128xf32, #tpu.memory_space<vmem>>, vector<128x128xf32>
    %48 = arith.mulf %43, %47 : vector<128x128xf32>
    %c0_32 = arith.constant 0 : index
    %c0_33 = arith.constant 0 : index
    %49 = vector.load %arg14[%c0_32, %c0_33] : memref<128x128xf32, #tpu.memory_space<vmem>>, vector<128x128xf32>
    %c0_34 = arith.constant 0 : index
    %c0_35 = arith.constant 0 : index
    %50 = vector.load %arg15[%c0_34, %c0_35] : memref<128x128xf32, #tpu.memory_space<vmem>>, vector<128x128xf32>
    %cst_36 = arith.constant -1.000000e+29 : f32
    %51 = vector.broadcast %cst_36 : f32 to vector<128x128xf32>
    %52 = arith.cmpf ogt, %29, %51 : vector<128x128xf32>
    %53 = arith.subf %29, %41 : vector<128x128xf32>
    %54 = math.exp %53 : vector<128x128xf32>
    %cst_37 = arith.constant 0.000000e+00 : f32
    %55 = vector.broadcast %cst_37 : f32 to vector<128x128xf32>
    %56 = arith.select %52, %54, %55 : vector<128x128xi1>, vector<128x128xf32>
    %cst_38 = arith.constant -1.000000e+29 : f32
    %57 = vector.broadcast %cst_38 : f32 to vector<128x128xf32>
    %58 = arith.cmpf ogt, %31, %57 : vector<128x128xf32>
    %cst_39 = arith.constant 0.000000e+00 : f32
    %59 = vector.broadcast %cst_39 : f32 to vector<128x128xf32>
    %60 = arith.subf %59, %31 : vector<128x128xf32>
    %61 = math.exp %60 : vector<128x128xf32>
    %cst_40 = arith.constant 0.000000e+00 : f32
    %62 = vector.broadcast %cst_40 : f32 to vector<128x128xf32>
    %63 = arith.select %58, %61, %62 : vector<128x128xi1>, vector<128x128xf32>
    %64 = arith.addf %46, %56 : vector<128x128xf32>
    %65 = arith.mulf %29, %56 : vector<128x128xf32>
    %66 = arith.addf %48, %65 : vector<128x128xf32>
    %67 = arith.addf %49, %63 : vector<128x128xf32>
    %68 = arith.mulf %31, %63 : vector<128x128xf32>
    %69 = arith.addf %50, %68 : vector<128x128xf32>
    %c0_41 = arith.constant 0 : index
    %c0_42 = arith.constant 0 : index
    %70 = vector.load %arg12[%c0_41, %c0_42] : memref<128x128xf32, #tpu.memory_space<vmem>>, vector<128x128xf32>
    tpu.vector_store %arg12[%c0_41, %c0_42], %64 {strides = array<i32>} : memref<128x128xf32, #tpu.memory_space<vmem>>, vector<128x128xf32>,
    %c0_43 = arith.constant 0 : index
    %c0_44 = arith.constant 0 : index
    %71 = vector.load %arg13[%c0_43, %c0_44] : memref<128x128xf32, #tpu.memory_space<vmem>>, vector<128x128xf32>
    tpu.vector_store %arg13[%c0_43, %c0_44], %66 {strides = array<i32>} : memref<128x128xf32, #tpu.memory_space<vmem>>, vector<128x128xf32>,
    %c0_45 = arith.constant 0 : index
    %c0_46 = arith.constant 0 : index
    %72 = vector.load %arg14[%c0_45, %c0_46] : memref<128x128xf32, #tpu.memory_space<vmem>>, vector<128x128xf32>
    tpu.vector_store %arg14[%c0_45, %c0_46], %67 {strides = array<i32>} : memref<128x128xf32, #tpu.memory_space<vmem>>, vector<128x128xf32>,
    %c0_47 = arith.constant 0 : index
    %c0_48 = arith.constant 0 : index
    %73 = vector.load %arg15[%c0_47, %c0_48] : memref<128x128xf32, #tpu.memory_space<vmem>>, vector<128x128xf32>
    tpu.vector_store %arg15[%c0_47, %c0_48], %69 {strides = array<i32>} : memref<128x128xf32, #tpu.memory_space<vmem>>, vector<128x128xf32>,
    %c0_i32_49 = arith.constant 0 : i32
    %74 = arith.cmpi eq, %arg1, %c0_i32_49 : i32
    %75 = arith.extui %74 : i1 to i32
    %c0_i32_50 = arith.constant 0 : i32
    %76 = arith.cmpi ne, %75, %c0_i32_50 : i32
    scf.if %76 {
      %c0_51 = arith.constant 0 : index
      %c0_52 = arith.constant 0 : index
      %77 = vector.load %arg11[%c0_51, %c0_52] : memref<128x128xf32, #tpu.memory_space<vmem>>, vector<128x128xf32>
      %cst_53 = arith.constant -1.000000e+29 : f32
      %78 = vector.broadcast %cst_53 : f32 to vector<128x128xf32>
      %79 = arith.cmpf ogt, %77, %78 : vector<128x128xf32>
      %cst_54 = arith.constant 0.000000e+00 : f32
      %80 = vector.broadcast %cst_54 : f32 to vector<128x128xf32>
      %81 = arith.select %79, %77, %80 : vector<128x128xi1>, vector<128x128xf32>
      %cst_55 = arith.constant dense<0xFF800000> : vector<128xf32>
      %82 = vector.multi_reduction <maximumf>, %77, %cst_55 [1] : vector<128x128xf32> to vector<128xf32>
      %83 = vector.shape_cast %82 : vector<128xf32> to vector<128x1xf32>
      %cst_56 = arith.constant -1.000000e+29 : f32
      %84 = vector.broadcast %cst_56 : f32 to vector<128x1xf32>
      %85 = arith.cmpf ogt, %83, %84 : vector<128x1xf32>
      %cst_57 = arith.constant 0.000000e+00 : f32
      %86 = vector.broadcast %cst_57 : f32 to vector<128x1xf32>
      %87 = arith.select %85, %83, %86 : vector<128x1xi1>, vector<128x1xf32>
      %88 = vector.broadcast %87 : vector<128x1xf32> to vector<128x128xf32>
      %89 = arith.subf %81, %88 : vector<128x128xf32>
      %90 = math.exp %89 : vector<128x128xf32>
      %c0_58 = arith.constant 0 : index
      %c0_59 = arith.constant 0 : index
      %91 = vector.load %arg12[%c0_58, %c0_59] : memref<128x128xf32, #tpu.memory_space<vmem>>, vector<128x128xf32>
      %92 = arith.mulf %90, %91 : vector<128x128xf32>
      %cst_60 = arith.constant dense<0.000000e+00> : vector<128xf32>
      %93 = vector.multi_reduction <add>, %92, %cst_60 [1] : vector<128x128xf32> to vector<128xf32>
      %94 = vector.shape_cast %93 : vector<128xf32> to vector<128x1xf32>
      %c0_61 = arith.constant 0 : index
      %c0_62 = arith.constant 0 : index
      %95 = vector.load %arg13[%c0_61, %c0_62] : memref<128x128xf32, #tpu.memory_space<vmem>>, vector<128x128xf32>
      %96 = arith.mulf %90, %95 : vector<128x128xf32>
      %cst_63 = arith.constant dense<0.000000e+00> : vector<128xf32>
      %97 = vector.multi_reduction <add>, %96, %cst_63 [1] : vector<128x128xf32> to vector<128xf32>
      %98 = vector.shape_cast %97 : vector<128xf32> to vector<128x1xf32>
      %c0_64 = arith.constant 0 : index
      %c0_65 = arith.constant 0 : index
      %99 = vector.load %arg14[%c0_64, %c0_65] : memref<128x128xf32, #tpu.memory_space<vmem>>, vector<128x128xf32>
      %cst_66 = arith.constant dense<0.000000e+00> : vector<128xf32>
      %100 = vector.multi_reduction <add>, %99, %cst_66 [1] : vector<128x128xf32> to vector<128xf32>
      %101 = vector.shape_cast %100 : vector<128xf32> to vector<128x1xf32>
      %c0_67 = arith.constant 0 : index
      %c0_68 = arith.constant 0 : index
      %102 = vector.load %arg15[%c0_67, %c0_68] : memref<128x128xf32, #tpu.memory_space<vmem>>, vector<128x128xf32>
      %cst_69 = arith.constant dense<0.000000e+00> : vector<128xf32>
      %103 = vector.multi_reduction <add>, %102, %cst_69 [1] : vector<128x128xf32> to vector<128xf32>
      %104 = vector.shape_cast %103 : vector<128xf32> to vector<128x1xf32>
      %105 = arith.divf %98, %94 : vector<128x1xf32>
      %106 = arith.divf %104, %101 : vector<128x1xf32>
      %107 = arith.subf %105, %106 : vector<128x1xf32>
      %cst_70 = arith.constant 0.000000e+00 : f32
      %108 = vector.broadcast %cst_70 : f32 to vector<128x1xf32>
      %109 = arith.maximumf %108, %107 : vector<128x1xf32>
      %110 = arith.subf %108, %107 : vector<128x1xf32>
      %111 = arith.cmpf one, %110, %110 : vector<128x1xf32>
      %112 = arith.addf %108, %107 : vector<128x1xf32>
      %113 = math.absf %110 : vector<128x1xf32>
      %cst_71 = arith.constant 0.000000e+00 : f32
      %114 = vector.broadcast %cst_71 : f32 to vector<128x1xf32>
      %115 = arith.subf %114, %113 : vector<128x1xf32>
      %116 = math.exp %115 : vector<128x1xf32>
      %117 = math.log1p %116 : vector<128x1xf32>
      %118 = arith.addf %109, %117 : vector<128x1xf32>
      %119 = arith.select %111, %112, %118 : vector<128x1xi1>, vector<128x1xf32>
      %c0_72 = arith.constant 0 : index
      %c0_73 = arith.constant 0 : index
      %120 = vector.load %arg10[%c0_72, %c0_73] : memref<128x1xf32, #tpu.memory_space<vmem>>, vector<128x1xf32>
      tpu.vector_store %arg10[%c0_72, %c0_73], %119 {strides = array<i32>} : memref<128x1xf32, #tpu.memory_space<vmem>>, vector<128x1xf32>,
    } else {
    }
    return
  }
  func.func @transform_0(%arg0: i32, %arg1: i32) -> (i32, i32) {
    %c0_i32 = arith.constant 0 : i32
    %c0_i32_0 = arith.constant 0 : i32
    return %arg0, %c0_i32 : i32, i32
  }
  func.func @transform_1(%arg0: i32, %arg1: i32) -> (i32, i32) {
    %c0_i32 = arith.constant 0 : i32
    %c0_i32_0 = arith.constant 0 : i32
    return %arg1, %c0_i32 : i32, i32
  }
  func.func @transform_2(%arg0: i32, %arg1: i32) -> (i32, i32) {
    %c0_i32 = arith.constant 0 : i32
    %c0_i32_0 = arith.constant 0 : i32
    return %arg0, %c0_i32 : i32, i32
  }
  func.func @transform_3(%arg0: i32, %arg1: i32) -> (i32, i32) {
    %c0_i32 = arith.constant 0 : i32
    %c0_i32_0 = arith.constant 0 : i32
    return %c0_i32, %arg1 : i32, i32
  }
  func.func @transform_4(%arg0: i32, %arg1: i32) -> (i32, i32) {
    %c0_i32 = arith.constant 0 : i32
    %c0_i32_0 = arith.constant 0 : i32
    return %arg0, %c0_i32 : i32, i32
  }
  func.func @transform_5(%arg0: i32, %arg1: i32) -> (i32, i32) {
    %c0_i32 = arith.constant 0 : i32
    %c0_i32_0 = arith.constant 0 : i32
    return %c0_i32, %arg1 : i32, i32
  }
  func.func @transform_6(%arg0: i32, %arg1: i32) -> (i32, i32) {
    %c0_i32 = arith.constant 0 : i32
    %c0_i32_0 = arith.constant 0 : i32
    return %arg0, %c0_i32 : i32, i32
  }
  func.func @transform_7(%arg0: i32, %arg1: i32) -> (i32, i32) {
    %c0_i32 = arith.constant 0 : i32
    %c0_i32_0 = arith.constant 0 : i32
    return %c0_i32, %arg1 : i32, i32
  }
  func.func @transform_8(%arg0: i32, %arg1: i32) -> (i32, i32) {
    %c0_i32 = arith.constant 0 : i32
    %c0_i32_0 = arith.constant 0 : i32
    return %arg0, %c0_i32 : i32, i32
  }
}

</mosaic_0001>

<llo_original>
// kernel: tpu_custom_call.1
$region0: #{tpu_custom_call.1}
  #allocation0 [shape = 'u32[]', space=smem, size = 0x4, offset = 0x4, fixed_abs, tag = 'smem constant byte address 0x4 - core index']
  #allocation1 [shape = 'u32[144,128]{1,0:T(1,128)}', space=vmem, size = 0x12000, scoped, tag = 'internal scratch']
  #allocation2 [shape = 'f32[128,128]{1,0:T(8,128)}', space=vmem, size = 0x10000, scoped, tag = 'scratch operand']
  #allocation3 [shape = 'f32[128,128]{1,0:T(8,128)}', space=vmem, size = 0x10000, scoped, tag = 'scratch operand']
  #allocation4 [shape = 'f32[128,128]{1,0:T(8,128)}', space=vmem, size = 0x10000, scoped, tag = 'scratch operand']
  #allocation5 [shape = 'f32[128,128]{1,0:T(8,128)}', space=vmem, size = 0x10000, scoped, tag = 'scratch operand']
  #allocation6 [shape = 'f32[128,128]{1,0:T(8,128)}', space=vmem, size = 0x10000, scoped, tag = 'scratch operand']
  %s0 = inlined_call_operand.vmem [shape: f32[128,32], index: 0, kind: input, shape index: {}]
  %s1 = inlined_call_operand.vmem [shape: f32[128,32], index: 1, kind: input, shape index: {}]
  %s2 = inlined_call_operand.vmem [shape: s32[128,1], index: 2, kind: input, shape index: {}]
  %s3 = inlined_call_operand.vmem [shape: s32[1,128], index: 3, kind: input, shape index: {}]
  %s4 = inlined_call_operand.vmem [shape: f32[128,1], index: 4, kind: input, shape index: {}]
  %s5 = inlined_call_operand.vmem [shape: f32[1,128], index: 5, kind: input, shape index: {}]
  %s6 = inlined_call_operand.vmem [shape: s32[128,1], index: 6, kind: input, shape index: {}]
  %s7 = inlined_call_operand.vmem [shape: s32[1,128], index: 7, kind: input, shape index: {}]
  %s8 = inlined_call_operand.vmem [shape: f32[128,1], index: 8, kind: output, shape index: {}]
  %s9 = sld [smem:[#allocation0]]
  $region50: #{tpu_custom_call.1} parent=0
    _
  %s11 = ssub.s32 1, %s9
  %s12 = scalar_select 0, %s11, %s9
  // Predicated region
  $region2: #{tpu_custom_call.1} parent=0 // pred_check
    _
  $region3: #{tpu_custom_call.1} parent=0 // pred_check_branch
    %14 = sbr.rel (0) target = $region5
  $region4: #{tpu_custom_call.1} parent=0 // pred_region
    _
  $region5: #{tpu_custom_call.1} parent=0 // pred_fallthru
    _
  // Predicated region
  $region6: #{tpu_custom_call.1} parent=0 // pred_check
    _
  $region7: #{tpu_custom_call.1} parent=0 // pred_check_branch
    %16 = sbr.rel (0) target = $region9
  $region8: #{tpu_custom_call.1} parent=0 // pred_region
    _
  $region9: #{tpu_custom_call.1} parent=0 // pred_fallthru
    _
  // Predicated region
  $region10: #{tpu_custom_call.1} parent=0 // pred_check
    _
  $region11: #{tpu_custom_call.1} parent=0 // pred_check_branch
    %18 = sbr.rel (0) target = $region13
  $region12: #{tpu_custom_call.1} parent=0 // pred_region
    _
  $region13: #{tpu_custom_call.1} parent=0 // pred_fallthru
    _
  // Predicated region
  $region14: #{tpu_custom_call.1} parent=0 // pred_check
    _
  $region15: #{tpu_custom_call.1} parent=0 // pred_check_branch
    %20 = sbr.rel (0) target = $region17
  $region16: #{tpu_custom_call.1} parent=0 // pred_region
    _
  $region17: #{tpu_custom_call.1} parent=0 // pred_fallthru
    _
  // Predicated region
  $region18: #{tpu_custom_call.1} parent=0 // pred_check
    _
  $region19: #{tpu_custom_call.1} parent=0 // pred_check_branch
    %22 = sbr.rel (0) target = $region21
  $region20: #{tpu_custom_call.1} parent=0 // pred_region
    _
  $region21: #{tpu_custom_call.1} parent=0 // pred_fallthru
    _
  // Predicated region
  $region22: #{tpu_custom_call.1} parent=0 // pred_check
    _
  $region23: #{tpu_custom_call.1} parent=0 // pred_check_branch
    %24 = sbr.rel (0) target = $region25
  $region24: #{tpu_custom_call.1} parent=0 // pred_region
    _
  $region25: #{tpu_custom_call.1} parent=0 // pred_fallthru
    _
  // Predicated region
  $region26: #{tpu_custom_call.1} parent=0 // pred_check
    _
  $region27: #{tpu_custom_call.1} parent=0 // pred_check_branch
    %26 = sbr.rel (0) target = $region29
  $region28: #{tpu_custom_call.1} parent=0 // pred_region
    _
  $region29: #{tpu_custom_call.1} parent=0 // pred_fallthru
    _
  // Predicated region
  $region30: #{tpu_custom_call.1} parent=0 // pred_check
    _
  $region31: #{tpu_custom_call.1} parent=0 // pred_check_branch
    %28 = sbr.rel (0) target = $region33
  $region32: #{tpu_custom_call.1} parent=0 // pred_region
    _
  $region33: #{tpu_custom_call.1} parent=0 // pred_fallthru
    _
  %p29 = scmp.eq.s32.totalorder 0, 0
  // Predicated region
  $region34: #{tpu_custom_call.1} parent=0 // pred_check
    %p30 = pneg %p29
  $region35: #{tpu_custom_call.1} parent=0 // pred_check_branch
    %32 = sbr.rel (%p30) target = $region37
  $region36: #{tpu_custom_call.1} parent=0 // pred_region
    %33 = vst [vmem:[#allocation2] sm:$0xff] -1e+30
    %34 = vst [vmem:[#allocation2 + $0x8] sm:$0xff] -1e+30
    %35 = vst [vmem:[#allocation2 + $0x10] sm:$0xff] -1e+30
    %36 = vst [vmem:[#allocation2 + $0x18] sm:$0xff] -1e+30
    %37 = vst [vmem:[#allocation2 + $0x20] sm:$0xff] -1e+30
    %38 = vst [vmem:[#allocation2 + $0x28] sm:$0xff] -1e+30
    %39 = vst [vmem:[#allocation2 + $0x30] sm:$0xff] -1e+30
    %40 = vst [vmem:[#allocation2 + $0x38] sm:$0xff] -1e+30
    %41 = vst [vmem:[#allocation2 + $0x40] sm:$0xff] -1e+30
    %42 = vst [vmem:[#allocation2 + $0x48] sm:$0xff] -1e+30
    %43 = vst [vmem:[#allocation2 + $0x50] sm:$0xff] -1e+30
    %44 = vst [vmem:[#allocation2 + $0x58] sm:$0xff] -1e+30
    %45 = vst [vmem:[#allocation2 + $0x60] sm:$0xff] -1e+30
    %46 = vst [vmem:[#allocation2 + $0x68] sm:$0xff] -1e+30
    %47 = vst [vmem:[#allocation2 + $0x70] sm:$0xff] -1e+30
    %48 = vst [vmem:[#allocation2 + $0x78] sm:$0xff] -1e+30
    %49 = vst [vmem:[#allocation3] sm:$0xff] 0.0
    %50 = vst [vmem:[#allocation3 + $0x8] sm:$0xff] 0.0
    %51 = vst [vmem:[#allocation3 + $0x10] sm:$0xff] 0.0
    %52 = vst [vmem:[#allocation3 + $0x18] sm:$0xff] 0.0
    %53 = vst [vmem:[#allocation3 + $0x20] sm:$0xff] 0.0
    %54 = vst [vmem:[#allocation3 + $0x28] sm:$0xff] 0.0
    %55 = vst [vmem:[#allocation3 + $0x30] sm:$0xff] 0.0
    %56 = vst [vmem:[#allocation3 + $0x38] sm:$0xff] 0.0
    %57 = vst [vmem:[#allocation3 + $0x40] sm:$0xff] 0.0
    %58 = vst [vmem:[#allocation3 + $0x48] sm:$0xff] 0.0
    %59 = vst [vmem:[#allocation3 + $0x50] sm:$0xff] 0.0
    %60 = vst [vmem:[#allocation3 + $0x58] sm:$0xff] 0.0
    %61 = vst [vmem:[#allocation3 + $0x60] sm:$0xff] 0.0
    %62 = vst [vmem:[#allocation3 + $0x68] sm:$0xff] 0.0
    %63 = vst [vmem:[#allocation3 + $0x70] sm:$0xff] 0.0
    %64 = vst [vmem:[#allocation3 + $0x78] sm:$0xff] 0.0
    %65 = vst [vmem:[#allocation4] sm:$0xff] 0.0
    %66 = vst [vmem:[#allocation4 + $0x8] sm:$0xff] 0.0
    %67 = vst [vmem:[#allocation4 + $0x10] sm:$0xff] 0.0
    %68 = vst [vmem:[#allocation4 + $0x18] sm:$0xff] 0.0
    %69 = vst [vmem:[#allocation4 + $0x20] sm:$0xff] 0.0
    %70 = vst [vmem:[#allocation4 + $0x28] sm:$0xff] 0.0
    %71 = vst [vmem:[#allocation4 + $0x30] sm:$0xff] 0.0
    %72 = vst [vmem:[#allocation4 + $0x38] sm:$0xff] 0.0
    %73 = vst [vmem:[#allocation4 + $0x40] sm:$0xff] 0.0
    %74 = vst [vmem:[#allocation4 + $0x48] sm:$0xff] 0.0
    %75 = vst [vmem:[#allocation4 + $0x50] sm:$0xff] 0.0
    %76 = vst [vmem:[#allocation4 + $0x58] sm:$0xff] 0.0
    %77 = vst [vmem:[#allocation4 + $0x60] sm:$0xff] 0.0
    %78 = vst [vmem:[#allocation4 + $0x68] sm:$0xff] 0.0
    %79 = vst [vmem:[#allocation4 + $0x70] sm:$0xff] 0.0
    %80 = vst [vmem:[#allocation4 + $0x78] sm:$0xff] 0.0
    %81 = vst [vmem:[#allocation5] sm:$0xff] 0.0
    %82 = vst [vmem:[#allocation5 + $0x8] sm:$0xff] 0.0
    %83 = vst [vmem:[#allocation5 + $0x10] sm:$0xff] 0.0
    %84 = vst [vmem:[#allocation5 + $0x18] sm:$0xff] 0.0
    %85 = vst [vmem:[#allocation5 + $0x20] sm:$0xff] 0.0
    %86 = vst [vmem:[#allocation5 + $0x28] sm:$0xff] 0.0
    %87 = vst [vmem:[#allocation5 + $0x30] sm:$0xff] 0.0
    %88 = vst [vmem:[#allocation5 + $0x38] sm:$0xff] 0.0
    %89 = vst [vmem:[#allocation5 + $0x40] sm:$0xff] 0.0
    %90 = vst [vmem:[#allocation5 + $0x48] sm:$0xff] 0.0
    %91 = vst [vmem:[#allocation5 + $0x50] sm:$0xff] 0.0
    %92 = vst [vmem:[#allocation5 + $0x58] sm:$0xff] 0.0
    %93 = vst [vmem:[#allocation5 + $0x60] sm:$0xff] 0.0
    %94 = vst [vmem:[#allocation5 + $0x68] sm:$0xff] 0.0
    %95 = vst [vmem:[#allocation5 + $0x70] sm:$0xff] 0.0
    %96 = vst [vmem:[#allocation5 + $0x78] sm:$0xff] 0.0
    %97 = vst [vmem:[#allocation6] sm:$0xff] 0.0
    %98 = vst [vmem:[#allocation6 + $0x8] sm:$0xff] 0.0
    %99 = vst [vmem:[#allocation6 + $0x10] sm:$0xff] 0.0
    %100 = vst [vmem:[#allocation6 + $0x18] sm:$0xff] 0.0
    %101 = vst [vmem:[#allocation6 + $0x20] sm:$0xff] 0.0
    %102 = vst [vmem:[#allocation6 + $0x28] sm:$0xff] 0.0
    %103 = vst [vmem:[#allocation6 + $0x30] sm:$0xff] 0.0
    %104 = vst [vmem:[#allocation6 + $0x38] sm:$0xff] 0.0
    %105 = vst [vmem:[#allocation6 + $0x40] sm:$0xff] 0.0
    %106 = vst [vmem:[#allocation6 + $0x48] sm:$0xff] 0.0
    %107 = vst [vmem:[#allocation6 + $0x50] sm:$0xff] 0.0
    %108 = vst [vmem:[#allocation6 + $0x58] sm:$0xff] 0.0
    %109 = vst [vmem:[#allocation6 + $0x60] sm:$0xff] 0.0
    %110 = vst [vmem:[#allocation6 + $0x68] sm:$0xff] 0.0
    %111 = vst [vmem:[#allocation6 + $0x70] sm:$0xff] 0.0
    %112 = vst [vmem:[#allocation6 + $0x78] sm:$0xff] 0.0
  $region37: #{tpu_custom_call.1} parent=0 // pred_fallthru
    _
  %v113 = vld [vmem:[%s0] sm:$0xff]
  %v114 = vld [vmem:[%s0 + $0x8] sm:$0xff]
  %v115 = vld [vmem:[%s0 + $0x10] sm:$0xff]
  %v116 = vld [vmem:[%s0 + $0x18] sm:$0xff]
  %v117 = vld [vmem:[%s0 + $0x20] sm:$0xff]
  %v118 = vld [vmem:[%s0 + $0x28] sm:$0xff]
  %v119 = vld [vmem:[%s0 + $0x30] sm:$0xff]
  %v120 = vld [vmem:[%s0 + $0x38] sm:$0xff]
  %v121 = vld [vmem:[%s0 + $0x40] sm:$0xff]
  %v122 = vld [vmem:[%s0 + $0x48] sm:$0xff]
  %v123 = vld [vmem:[%s0 + $0x50] sm:$0xff]
  %v124 = vld [vmem:[%s0 + $0x58] sm:$0xff]
  %v125 = vld [vmem:[%s0 + $0x60] sm:$0xff]
  %v126 = vld [vmem:[%s0 + $0x68] sm:$0xff]
  %v127 = vld [vmem:[%s0 + $0x70] sm:$0xff]
  %v128 = vld [vmem:[%s0 + $0x78] sm:$0xff]
  %v129 = vld [vmem:[%s1] sm:$0xff]
  %v130 = vld [vmem:[%s1 + $0x8] sm:$0xff]
  %v131 = vld [vmem:[%s1 + $0x10] sm:$0xff]
  %v132 = vld [vmem:[%s1 + $0x18] sm:$0xff]
  %v133 = vld [vmem:[%s1 + $0x20] sm:$0xff]
  %v134 = vld [vmem:[%s1 + $0x28] sm:$0xff]
  %v135 = vld [vmem:[%s1 + $0x30] sm:$0xff]
  %v136 = vld [vmem:[%s1 + $0x38] sm:$0xff]
  %v137 = vld [vmem:[%s1 + $0x40] sm:$0xff]
  %v138 = vld [vmem:[%s1 + $0x48] sm:$0xff]
  %v139 = vld [vmem:[%s1 + $0x50] sm:$0xff]
  %v140 = vld [vmem:[%s1 + $0x58] sm:$0xff]
  %v141 = vld [vmem:[%s1 + $0x60] sm:$0xff]
  %v142 = vld [vmem:[%s1 + $0x68] sm:$0xff]
  %v143 = vld [vmem:[%s1 + $0x70] sm:$0xff]
  %v144 = vld [vmem:[%s1 + $0x78] sm:$0xff]
  %vm145 = vcmask 261120
  %v147 = vsel %vm145, %v113, 0
  %v150 = vsel %vm145, %v114, 0
  %v153 = vsel %vm145, %v115, 0
  %v156 = vsel %vm145, %v116, 0
  %v159 = vsel %vm145, %v117, 0
  %v162 = vsel %vm145, %v118, 0
  %v165 = vsel %vm145, %v119, 0
  %v168 = vsel %vm145, %v120, 0
  %v171 = vsel %vm145, %v121, 0
  %v174 = vsel %vm145, %v122, 0
  %v177 = vsel %vm145, %v123, 0
  %v180 = vsel %vm145, %v124, 0
  %v183 = vsel %vm145, %v125, 0
  %v186 = vsel %vm145, %v126, 0
  %v189 = vsel %vm145, %v127, 0
  %v192 = vsel %vm145, %v128, 0
  %v195 = vsel %vm145, %v129, 0
  %v198 = vsel %vm145, %v130, 0
  %v201 = vsel %vm145, %v131, 0
  %v204 = vsel %vm145, %v132, 0
  %v207 = vsel %vm145, %v133, 0
  %v210 = vsel %vm145, %v134, 0
  %v213 = vsel %vm145, %v135, 0
  %v216 = vsel %vm145, %v136, 0
  %v219 = vsel %vm145, %v137, 0
  %v222 = vsel %vm145, %v138, 0
  %v225 = vsel %vm145, %v139, 0
  %v228 = vsel %vm145, %v140, 0
  %v231 = vsel %vm145, %v141, 0
  %v234 = vsel %vm145, %v142, 0
  %v237 = vsel %vm145, %v143, 0
  %v240 = vsel %vm145, %v144, 0
  %242 = vmatprep.subr.mxu0 0.0
  %243 = vmatpush1.xpose.msra.mxu0 %v195
  %244 = vmatprep.subr.mxu0 0.0
  %245 = vmatpush1.xpose.msra.mxu0 %v198
  %246 = vmatprep.subr.mxu0 0.0
  %247 = vmatpush1.xpose.msra.mxu0 %v201
  %248 = vmatprep.subr.mxu0 0.0
  %249 = vmatpush1.xpose.msra.mxu0 %v204
  %250 = vmatprep.subr.mxu0 0.0
  %251 = vmatpush1.xpose.msra.mxu0 %v207
  %252 = vmatprep.subr.mxu0 0.0
  %253 = vmatpush1.xpose.msra.mxu0 %v210
  %254 = vmatprep.subr.mxu0 0.0
  %255 = vmatpush1.xpose.msra.mxu0 %v213
  %256 = vmatprep.subr.mxu0 0.0
  %257 = vmatpush1.xpose.msra.mxu0 %v216
  %258 = vmatprep.subr.mxu0 0.0
  %259 = vmatpush1.xpose.msra.mxu0 %v219
  %260 = vmatprep.subr.mxu0 0.0
  %261 = vmatpush1.xpose.msra.mxu0 %v222
  %262 = vmatprep.subr.mxu0 0.0
  %263 = vmatpush1.xpose.msra.mxu0 %v225
  %264 = vmatprep.subr.mxu0 0.0
  %265 = vmatpush1.xpose.msra.mxu0 %v228
  %266 = vmatprep.subr.mxu0 0.0
  %267 = vmatpush1.xpose.msra.mxu0 %v231
  %268 = vmatprep.subr.mxu0 0.0
  %269 = vmatpush1.xpose.msra.mxu0 %v234
  %270 = vmatprep.subr.mxu0 0.0
  %271 = vmatpush1.xpose.msra.mxu0 %v237
  %272 = vmatprep.subr.mxu0 0.0
  %273 = vmatpush1.xpose.msra.mxu0 %v240
  %274 = vmatprep.subr.mxu0 0.0
  %275 = vmatpush1.xpose.msra.mxu0 0.0
  %276 = vmatprep.subr.mxu0 0.0
  %277 = vmatpush1.xpose.msra.mxu0 0.0
  %278 = vmatprep.subr.mxu0 0.0
  %279 = vmatpush1.xpose.msra.mxu0 0.0
  %280 = vmatprep.subr.mxu0 0.0
  %281 = vmatpush1.xpose.msra.mxu0 0.0
  %282 = vmatprep.subr.mxu0 0.0
  %283 = vmatpush1.xpose.msra.mxu0 0.0
  %284 = vmatprep.subr.mxu0 0.0
  %285 = vmatpush1.xpose.msra.mxu0 0.0
  %286 = vmatprep.subr.mxu0 0.0
  %287 = vmatpush1.xpose.msra.mxu0 0.0
  %288 = vmatprep.subr.mxu0 0.0
  %289 = vmatpush1.xpose.msra.mxu0 0.0
  %290 = vmatprep.subr.mxu0 0.0
  %291 = vmatpush1.xpose.msra.mxu0 0.0
  %292 = vmatprep.subr.mxu0 0.0
  %293 = vmatpush1.xpose.msra.mxu0 0.0
  %294 = vmatprep.subr.mxu0 0.0
  %295 = vmatpush1.xpose.msra.mxu0 0.0
  %296 = vmatprep.subr.mxu0 0.0
  %297 = vmatpush1.xpose.msra.mxu0 0.0
  %298 = vmatprep.subr.mxu0 0.0
  %299 = vmatpush1.xpose.msra.mxu0 0.0
  %300 = vmatprep.subr.mxu0 0.0
  %301 = vmatpush1.xpose.msra.mxu0 0.0
  %302 = vmatprep.subr.mxu0 0.0
  %303 = vmatpush1.xpose.msra.mxu0 0.0
  %304 = vmatprep.subr.mxu0 0.0
  %305 = vmatpush1.xpose.msra.mxu0 0.0
  %306 = vmatprep.mubr.f32.mxu0 0.0
  %307 = vmatmul.mubr.f32.gmra.mrb[0].mxu0 %v147
  %v308 = vpop.f32.mrb[0].mxu0
  %v309 = vadd.f32 0.0, %v308
  %v310 = vpop.f32.mrb[0].mxu0
  %311 = vmatprep.mubr.f32.mxu0 0.0
  %312 = vmatmul.mubr.f32.gmra.mrb[0].mxu0 %v150
  %v313 = vpop.f32.mrb[0].mxu0
  %v314 = vadd.f32 0.0, %v313
  %v315 = vpop.f32.mrb[0].mxu0
  %316 = vmatprep.mubr.f32.mxu0 0.0
  %317 = vmatmul.mubr.f32.gmra.mrb[0].mxu0 %v153
  %v318 = vpop.f32.mrb[0].mxu0
  %v319 = vadd.f32 0.0, %v318
  %v320 = vpop.f32.mrb[0].mxu0
  %321 = vmatprep.mubr.f32.mxu0 0.0
  %322 = vmatmul.mubr.f32.gmra.mrb[0].mxu0 %v156
  %v323 = vpop.f32.mrb[0].mxu0
  %v324 = vadd.f32 0.0, %v323
  %v325 = vpop.f32.mrb[0].mxu0
  %326 = vmatprep.mubr.f32.mxu0 0.0
  %327 = vmatmul.mubr.f32.gmra.mrb[0].mxu0 %v159
  %v328 = vpop.f32.mrb[0].mxu0
  %v329 = vadd.f32 0.0, %v328
  %v330 = vpop.f32.mrb[0].mxu0
  %331 = vmatprep.mubr.f32.mxu0 0.0
  %332 = vmatmul.mubr.f32.gmra.mrb[0].mxu0 %v162
  %v333 = vpop.f32.mrb[0].mxu0
  %v334 = vadd.f32 0.0, %v333
  %v335 = vpop.f32.mrb[0].mxu0
  %336 = vmatprep.mubr.f32.mxu0 0.0
  %337 = vmatmul.mubr.f32.gmra.mrb[0].mxu0 %v165
  %v338 = vpop.f32.mrb[0].mxu0
  %v339 = vadd.f32 0.0, %v338
  %v340 = vpop.f32.mrb[0].mxu0
  %341 = vmatprep.mubr.f32.mxu0 0.0
  %342 = vmatmul.mubr.f32.gmra.mrb[0].mxu0 %v168
  %v343 = vpop.f32.mrb[0].mxu0
  %v344 = vadd.f32 0.0, %v343
  %v345 = vpop.f32.mrb[0].mxu0
  %346 = vmatprep.mubr.f32.mxu0 0.0
  %347 = vmatmul.mubr.f32.gmra.mrb[0].mxu0 %v171
  %v348 = vpop.f32.mrb[0].mxu0
  %v349 = vadd.f32 0.0, %v348
  %v350 = vpop.f32.mrb[0].mxu0
  %351 = vmatprep.mubr.f32.mxu0 0.0
  %352 = vmatmul.mubr.f32.gmra.mrb[0].mxu0 %v174
  %v353 = vpop.f32.mrb[0].mxu0
  %v354 = vadd.f32 0.0, %v353
  %v355 = vpop.f32.mrb[0].mxu0
  %356 = vmatprep.mubr.f32.mxu0 0.0
  %357 = vmatmul.mubr.f32.gmra.mrb[0].mxu0 %v177
  %v358 = vpop.f32.mrb[0].mxu0
  %v359 = vadd.f32 0.0, %v358
  %v360 = vpop.f32.mrb[0].mxu0
  %361 = vmatprep.mubr.f32.mxu0 0.0
  %362 = vmatmul.mubr.f32.gmra.mrb[0].mxu0 %v180
  %v363 = vpop.f32.mrb[0].mxu0
  %v364 = vadd.f32 0.0, %v363
  %v365 = vpop.f32.mrb[0].mxu0
  %366 = vmatprep.mubr.f32.mxu0 0.0
  %367 = vmatmul.mubr.f32.gmra.mrb[0].mxu0 %v183
  %v368 = vpop.f32.mrb[0].mxu0
  %v369 = vadd.f32 0.0, %v368
  %v370 = vpop.f32.mrb[0].mxu0
  %371 = vmatprep.mubr.f32.mxu0 0.0
  %372 = vmatmul.mubr.f32.gmra.mrb[0].mxu0 %v186
  %v373 = vpop.f32.mrb[0].mxu0
  %v374 = vadd.f32 0.0, %v373
  %v375 = vpop.f32.mrb[0].mxu0
  %376 = vmatprep.mubr.f32.mxu0 0.0
  %377 = vmatmul.mubr.f32.gmra.mrb[0].mxu0 %v189
  %v378 = vpop.f32.mrb[0].mxu0
  %v379 = vadd.f32 0.0, %v378
  %v380 = vpop.f32.mrb[0].mxu0
  %381 = vmatprep.mubr.f32.mxu0 0.0
  %382 = vmatmul.mubr.f32.gmra.mrb[0].mxu0 %v192
  %v383 = vpop.f32.mrb[0].mxu0
  %v384 = vadd.f32 0.0, %v383
  %v385 = vpop.f32.mrb[0].mxu0
  %386 = vdwg.mxu0
  %v387 = vld [vmem:[%s4] sm:$0xff]
  %v388 = vld [vmem:[%s4 + $0x8] sm:$0xff]
  %v389 = vld [vmem:[%s4 + $0x10] sm:$0xff]
  %v390 = vld [vmem:[%s4 + $0x18] sm:$0xff]
  %v391 = vld [vmem:[%s4 + $0x20] sm:$0xff]
  %v392 = vld [vmem:[%s4 + $0x28] sm:$0xff]
  %v393 = vld [vmem:[%s4 + $0x30] sm:$0xff]
  %v394 = vld [vmem:[%s4 + $0x38] sm:$0xff]
  %v395 = vld [vmem:[%s4 + $0x40] sm:$0xff]
  %v396 = vld [vmem:[%s4 + $0x48] sm:$0xff]
  %v397 = vld [vmem:[%s4 + $0x50] sm:$0xff]
  %v398 = vld [vmem:[%s4 + $0x58] sm:$0xff]
  %v399 = vld [vmem:[%s4 + $0x60] sm:$0xff]
  %v400 = vld [vmem:[%s4 + $0x68] sm:$0xff]
  %v401 = vld [vmem:[%s4 + $0x70] sm:$0xff]
  %v402 = vld [vmem:[%s4 + $0x78] sm:$0xff]
  %v403 = vld [vmem:[%s5] sm:$0x1]
  %405 = vset.pattern.permute.xlu0 0
  %406 = vperm.xlu0 %405, %v387
  %v407 = vpop.permute.xlu0 %406
  %410 = vset.pattern.permute.xlu0 0
  %411 = vperm.xlu0 %410, %v388
  %v412 = vpop.permute.xlu0 %411
  %415 = vset.pattern.permute.xlu0 0
  %416 = vperm.xlu0 %415, %v389
  %v417 = vpop.permute.xlu0 %416
  %420 = vset.pattern.permute.xlu0 0
  %421 = vperm.xlu0 %420, %v390
  %v422 = vpop.permute.xlu0 %421
  %425 = vset.pattern.permute.xlu0 0
  %426 = vperm.xlu0 %425, %v391
  %v427 = vpop.permute.xlu0 %426
  %430 = vset.pattern.permute.xlu0 0
  %431 = vperm.xlu0 %430, %v392
  %v432 = vpop.permute.xlu0 %431
  %435 = vset.pattern.permute.xlu0 0
  %436 = vperm.xlu0 %435, %v393
  %v437 = vpop.permute.xlu0 %436
  %440 = vset.pattern.permute.xlu0 0
  %441 = vperm.xlu0 %440, %v394
  %v442 = vpop.permute.xlu0 %441
  %445 = vset.pattern.permute.xlu0 0
  %446 = vperm.xlu0 %445, %v395
  %v447 = vpop.permute.xlu0 %446
  %450 = vset.pattern.permute.xlu0 0
  %451 = vperm.xlu0 %450, %v396
  %v452 = vpop.permute.xlu0 %451
  %455 = vset.pattern.permute.xlu0 0
  %456 = vperm.xlu0 %455, %v397
  %v457 = vpop.permute.xlu0 %456
  %460 = vset.pattern.permute.xlu0 0
  %461 = vperm.xlu0 %460, %v398
  %v462 = vpop.permute.xlu0 %461
  %465 = vset.pattern.permute.xlu0 0
  %466 = vperm.xlu0 %465, %v399
  %v467 = vpop.permute.xlu0 %466
  %470 = vset.pattern.permute.xlu0 0
  %471 = vperm.xlu0 %470, %v400
  %v472 = vpop.permute.xlu0 %471
  %475 = vset.pattern.permute.xlu0 0
  %476 = vperm.xlu0 %475, %v401
  %v477 = vpop.permute.xlu0 %476
  %480 = vset.pattern.permute.xlu0 0
  %481 = vperm.xlu0 %480, %v402
  %v482 = vpop.permute.xlu0 %481
  %v485 = vlaneseq
  %v486 = vshrl.u32 %v485, 7
  %v487 = vsub.s32 0, %v486
  %v488 = vrot.slane %v403, %v487
  %v490 = vadd.f32 %v407, %v488
  %v491 = vadd.f32 %v412, %v488
  %v492 = vadd.f32 %v417, %v488
  %v493 = vadd.f32 %v422, %v488
  %v494 = vadd.f32 %v427, %v488
  %v495 = vadd.f32 %v432, %v488
  %v496 = vadd.f32 %v437, %v488
  %v497 = vadd.f32 %v442, %v488
  %v498 = vadd.f32 %v447, %v488
  %v499 = vadd.f32 %v452, %v488
  %v500 = vadd.f32 %v457, %v488
  %v501 = vadd.f32 %v462, %v488
  %v502 = vadd.f32 %v467, %v488
  %v503 = vadd.f32 %v472, %v488
  %v504 = vadd.f32 %v477, %v488
  %v505 = vadd.f32 %v482, %v488
  %v506 = vmul.f32 %v309, 2.0
  %v507 = vmul.f32 %v314, 2.0
  %v508 = vmul.f32 %v319, 2.0
  %v509 = vmul.f32 %v324, 2.0
  %v510 = vmul.f32 %v329, 2.0
  %v511 = vmul.f32 %v334, 2.0
  %v512 = vmul.f32 %v339, 2.0
  %v513 = vmul.f32 %v344, 2.0
  %v514 = vmul.f32 %v349, 2.0
  %v515 = vmul.f32 %v354, 2.0
  %v516 = vmul.f32 %v359, 2.0
  %v517 = vmul.f32 %v364, 2.0
  %v518 = vmul.f32 %v369, 2.0
  %v519 = vmul.f32 %v374, 2.0
  %v520 = vmul.f32 %v379, 2.0
  %v521 = vmul.f32 %v384, 2.0
  %v522 = vsub.f32 %v490, %v506
  %v523 = vsub.f32 %v491, %v507
  %v524 = vsub.f32 %v492, %v508
  %v525 = vsub.f32 %v493, %v509
  %v526 = vsub.f32 %v494, %v510
  %v527 = vsub.f32 %v495, %v511
  %v528 = vsub.f32 %v496, %v512
  %v529 = vsub.f32 %v497, %v513
  %v530 = vsub.f32 %v498, %v514
  %v531 = vsub.f32 %v499, %v515
  %v532 = vsub.f32 %v500, %v516
  %v533 = vsub.f32 %v501, %v517
  %v534 = vsub.f32 %v502, %v518
  %v535 = vsub.f32 %v503, %v519
  %v536 = vsub.f32 %v504, %v520
  %v537 = vsub.f32 %v505, %v521
  %v538 = vmax.f32 %v522, 0.0
  %v539 = vmax.f32 %v523, 0.0
  %v540 = vmax.f32 %v524, 0.0
  %v541 = vmax.f32 %v525, 0.0
  %v542 = vmax.f32 %v526, 0.0
  %v543 = vmax.f32 %v527, 0.0
  %v544 = vmax.f32 %v528, 0.0
  %v545 = vmax.f32 %v529, 0.0
  %v546 = vmax.f32 %v530, 0.0
  %v547 = vmax.f32 %v531, 0.0
  %v548 = vmax.f32 %v532, 0.0
  %v549 = vmax.f32 %v533, 0.0
  %v550 = vmax.f32 %v534, 0.0
  %v551 = vmax.f32 %v535, 0.0
  %v552 = vmax.f32 %v536, 0.0
  %v553 = vmax.f32 %v537, 0.0
  %v554 = vrsqrt.pop %v538
  %v555 = vmul.f32 %v538, %v554
  %vm556 = vcmp.eq.f32.partialorder %v538, inf
  %v557 = vsel %vm556, %v538, %v555
  %vm558 = vcmp.eq.f32.partialorder %v538, 0.0
  %v559 = vand.u32 %v538, 2147483648
  %v560 = vsel %vm558, %v559, %v557
  %v561 = vrsqrt.pop %v539
  %v562 = vmul.f32 %v539, %v561
  %vm563 = vcmp.eq.f32.partialorder %v539, inf
  %v564 = vsel %vm563, %v539, %v562
  %vm565 = vcmp.eq.f32.partialorder %v539, 0.0
  %v566 = vand.u32 %v539, 2147483648
  %v567 = vsel %vm565, %v566, %v564
  %v568 = vrsqrt.pop %v540
  %v569 = vmul.f32 %v540, %v568
  %vm570 = vcmp.eq.f32.partialorder %v540, inf
  %v571 = vsel %vm570, %v540, %v569
  %vm572 = vcmp.eq.f32.partialorder %v540, 0.0
  %v573 = vand.u32 %v540, 2147483648
  %v574 = vsel %vm572, %v573, %v571
  %v575 = vrsqrt.pop %v541
  %v576 = vmul.f32 %v541, %v575
  %vm577 = vcmp.eq.f32.partialorder %v541, inf
  %v578 = vsel %vm577, %v541, %v576
  %vm579 = vcmp.eq.f32.partialorder %v541, 0.0
  %v580 = vand.u32 %v541, 2147483648
  %v581 = vsel %vm579, %v580, %v578
  %v582 = vrsqrt.pop %v542
  %v583 = vmul.f32 %v542, %v582
  %vm584 = vcmp.eq.f32.partialorder %v542, inf
  %v585 = vsel %vm584, %v542, %v583
  %vm586 = vcmp.eq.f32.partialorder %v542, 0.0
  %v587 = vand.u32 %v542, 2147483648
  %v588 = vsel %vm586, %v587, %v585
  %v589 = vrsqrt.pop %v543
  %v590 = vmul.f32 %v543, %v589
  %vm591 = vcmp.eq.f32.partialorder %v543, inf
  %v592 = vsel %vm591, %v543, %v590
  %vm593 = vcmp.eq.f32.partialorder %v543, 0.0
  %v594 = vand.u32 %v543, 2147483648
  %v595 = vsel %vm593, %v594, %v592
  %v596 = vrsqrt.pop %v544
  %v597 = vmul.f32 %v544, %v596
  %vm598 = vcmp.eq.f32.partialorder %v544, inf
  %v599 = vsel %vm598, %v544, %v597
  %vm600 = vcmp.eq.f32.partialorder %v544, 0.0
  %v601 = vand.u32 %v544, 2147483648
  %v602 = vsel %vm600, %v601, %v599
  %v603 = vrsqrt.pop %v545
  %v604 = vmul.f32 %v545, %v603
  %vm605 = vcmp.eq.f32.partialorder %v545, inf
  %v606 = vsel %vm605, %v545, %v604
  %vm607 = vcmp.eq.f32.partialorder %v545, 0.0
  %v608 = vand.u32 %v545, 2147483648
  %v609 = vsel %vm607, %v608, %v606
  %v610 = vrsqrt.pop %v546
  %v611 = vmul.f32 %v546, %v610
  %vm612 = vcmp.eq.f32.partialorder %v546, inf
  %v613 = vsel %vm612, %v546, %v611
  %vm614 = vcmp.eq.f32.partialorder %v546, 0.0
  %v615 = vand.u32 %v546, 2147483648
  %v616 = vsel %vm614, %v615, %v613
  %v617 = vrsqrt.pop %v547
  %v618 = vmul.f32 %v547, %v617
  %vm619 = vcmp.eq.f32.partialorder %v547, inf
  %v620 = vsel %vm619, %v547, %v618
  %vm621 = vcmp.eq.f32.partialorder %v547, 0.0
  %v622 = vand.u32 %v547, 2147483648
  %v623 = vsel %vm621, %v622, %v620
  %v624 = vrsqrt.pop %v548
  %v625 = vmul.f32 %v548, %v624
  %vm626 = vcmp.eq.f32.partialorder %v548, inf
  %v627 = vsel %vm626, %v548, %v625
  %vm628 = vcmp.eq.f32.partialorder %v548, 0.0
  %v629 = vand.u32 %v548, 2147483648
  %v630 = vsel %vm628, %v629, %v627
  %v631 = vrsqrt.pop %v549
  %v632 = vmul.f32 %v549, %v631
  %vm633 = vcmp.eq.f32.partialorder %v549, inf
  %v634 = vsel %vm633, %v549, %v632
  %vm635 = vcmp.eq.f32.partialorder %v549, 0.0
  %v636 = vand.u32 %v549, 2147483648
  %v637 = vsel %vm635, %v636, %v634
  %v638 = vrsqrt.pop %v550
  %v639 = vmul.f32 %v550, %v638
  %vm640 = vcmp.eq.f32.partialorder %v550, inf
  %v641 = vsel %vm640, %v550, %v639
  %vm642 = vcmp.eq.f32.partialorder %v550, 0.0
  %v643 = vand.u32 %v550, 2147483648
  %v644 = vsel %vm642, %v643, %v641
  %v645 = vrsqrt.pop %v551
  %v646 = vmul.f32 %v551, %v645
  %vm647 = vcmp.eq.f32.partialorder %v551, inf
  %v648 = vsel %vm647, %v551, %v646
  %vm649 = vcmp.eq.f32.partialorder %v551, 0.0
  %v650 = vand.u32 %v551, 2147483648
  %v651 = vsel %vm649, %v650, %v648
  %v652 = vrsqrt.pop %v552
  %v653 = vmul.f32 %v552, %v652
  %vm654 = vcmp.eq.f32.partialorder %v552, inf
  %v655 = vsel %vm654, %v552, %v653
  %vm656 = vcmp.eq.f32.partialorder %v552, 0.0
  %v657 = vand.u32 %v552, 2147483648
  %v658 = vsel %vm656, %v657, %v655
  %v659 = vrsqrt.pop %v553
  %v660 = vmul.f32 %v553, %v659
  %vm661 = vcmp.eq.f32.partialorder %v553, inf
  %v662 = vsel %vm661, %v553, %v660
  %vm663 = vcmp.eq.f32.partialorder %v553, 0.0
  %v664 = vand.u32 %v553, 2147483648
  %v665 = vsel %vm663, %v664, %v662
  %v666 = vld [vmem:[%s2] sm:$0xff]
  %v667 = vld [vmem:[%s2 + $0x8] sm:$0xff]
  %v668 = vld [vmem:[%s2 + $0x10] sm:$0xff]
  %v669 = vld [vmem:[%s2 + $0x18] sm:$0xff]
  %v670 = vld [vmem:[%s2 + $0x20] sm:$0xff]
  %v671 = vld [vmem:[%s2 + $0x28] sm:$0xff]
  %v672 = vld [vmem:[%s2 + $0x30] sm:$0xff]
  %v673 = vld [vmem:[%s2 + $0x38] sm:$0xff]
  %v674 = vld [vmem:[%s2 + $0x40] sm:$0xff]
  %v675 = vld [vmem:[%s2 + $0x48] sm:$0xff]
  %v676 = vld [vmem:[%s2 + $0x50] sm:$0xff]
  %v677 = vld [vmem:[%s2 + $0x58] sm:$0xff]
  %v678 = vld [vmem:[%s2 + $0x60] sm:$0xff]
  %v679 = vld [vmem:[%s2 + $0x68] sm:$0xff]
  %v680 = vld [vmem:[%s2 + $0x70] sm:$0xff]
  %v681 = vld [vmem:[%s2 + $0x78] sm:$0xff]
  %v682 = vld [vmem:[%s3] sm:$0x1]
  %683 = vset.pattern.permute.xlu0 0
  %684 = vperm.xlu0 %683, %v666
  %v685 = vpop.permute.xlu0 %684
  %686 = vset.pattern.permute.xlu0 0
  %687 = vperm.xlu0 %686, %v667
  %v688 = vpop.permute.xlu0 %687
  %689 = vset.pattern.permute.xlu0 0
  %690 = vperm.xlu0 %689, %v668
  %v691 = vpop.permute.xlu0 %690
  %692 = vset.pattern.permute.xlu0 0
  %693 = vperm.xlu0 %692, %v669
  %v694 = vpop.permute.xlu0 %693
  %695 = vset.pattern.permute.xlu0 0
  %696 = vperm.xlu0 %695, %v670
  %v697 = vpop.permute.xlu0 %696
  %698 = vset.pattern.permute.xlu0 0
  %699 = vperm.xlu0 %698, %v671
  %v700 = vpop.permute.xlu0 %699
  %701 = vset.pattern.permute.xlu0 0
  %702 = vperm.xlu0 %701, %v672
  %v703 = vpop.permute.xlu0 %702
  %704 = vset.pattern.permute.xlu0 0
  %705 = vperm.xlu0 %704, %v673
  %v706 = vpop.permute.xlu0 %705
  %707 = vset.pattern.permute.xlu0 0
  %708 = vperm.xlu0 %707, %v674
  %v709 = vpop.permute.xlu0 %708
  %710 = vset.pattern.permute.xlu0 0
  %711 = vperm.xlu0 %710, %v675
  %v712 = vpop.permute.xlu0 %711
  %713 = vset.pattern.permute.xlu0 0
  %714 = vperm.xlu0 %713, %v676
  %v715 = vpop.permute.xlu0 %714
  %716 = vset.pattern.permute.xlu0 0
  %717 = vperm.xlu0 %716, %v677
  %v718 = vpop.permute.xlu0 %717
  %719 = vset.pattern.permute.xlu0 0
  %720 = vperm.xlu0 %719, %v678
  %v721 = vpop.permute.xlu0 %720
  %722 = vset.pattern.permute.xlu0 0
  %723 = vperm.xlu0 %722, %v679
  %v724 = vpop.permute.xlu0 %723
  %725 = vset.pattern.permute.xlu0 0
  %726 = vperm.xlu0 %725, %v680
  %v727 = vpop.permute.xlu0 %726
  %728 = vset.pattern.permute.xlu0 0
  %729 = vperm.xlu0 %728, %v681
  %v730 = vpop.permute.xlu0 %729
  %v731 = vlaneseq
  %v732 = vshrl.u32 %v731, 7
  %v733 = vsub.s32 0, %v732
  %v734 = vrot.slane %v682, %v733
  %vm735 = vcmp.eq.s32.totalorder %v685, %v734
  %vm736 = vcmp.eq.s32.totalorder %v688, %v734
  %vm737 = vcmp.eq.s32.totalorder %v691, %v734
  %vm738 = vcmp.eq.s32.totalorder %v694, %v734
  %vm739 = vcmp.eq.s32.totalorder %v697, %v734
  %vm740 = vcmp.eq.s32.totalorder %v700, %v734
  %vm741 = vcmp.eq.s32.totalorder %v703, %v734
  %vm742 = vcmp.eq.s32.totalorder %v706, %v734
  %vm743 = vcmp.eq.s32.totalorder %v709, %v734
  %vm744 = vcmp.eq.s32.totalorder %v712, %v734
  %vm745 = vcmp.eq.s32.totalorder %v715, %v734
  %vm746 = vcmp.eq.s32.totalorder %v718, %v734
  %vm747 = vcmp.eq.s32.totalorder %v721, %v734
  %vm748 = vcmp.eq.s32.totalorder %v724, %v734
  %vm749 = vcmp.eq.s32.totalorder %v727, %v734
  %vm750 = vcmp.eq.s32.totalorder %v730, %v734
  %v751 = vld [vmem:[%s6] sm:$0xff]
  %v752 = vld [vmem:[%s6 + $0x8] sm:$0xff]
  %v753 = vld [vmem:[%s6 + $0x10] sm:$0xff]
  %v754 = vld [vmem:[%s6 + $0x18] sm:$0xff]
  %v755 = vld [vmem:[%s6 + $0x20] sm:$0xff]
  %v756 = vld [vmem:[%s6 + $0x28] sm:$0xff]
  %v757 = vld [vmem:[%s6 + $0x30] sm:$0xff]
  %v758 = vld [vmem:[%s6 + $0x38] sm:$0xff]
  %v759 = vld [vmem:[%s6 + $0x40] sm:$0xff]
  %v760 = vld [vmem:[%s6 + $0x48] sm:$0xff]
  %v761 = vld [vmem:[%s6 + $0x50] sm:$0xff]
  %v762 = vld [vmem:[%s6 + $0x58] sm:$0xff]
  %v763 = vld [vmem:[%s6 + $0x60] sm:$0xff]
  %v764 = vld [vmem:[%s6 + $0x68] sm:$0xff]
  %v765 = vld [vmem:[%s6 + $0x70] sm:$0xff]
  %v766 = vld [vmem:[%s6 + $0x78] sm:$0xff]
  %v767 = vld [vmem:[%s7] sm:$0x1]
  %768 = vset.pattern.permute.xlu0 0
  %769 = vperm.xlu0 %768, %v751
  %v770 = vpop.permute.xlu0 %769
  %771 = vset.pattern.permute.xlu0 0
  %772 = vperm.xlu0 %771, %v752
  %v773 = vpop.permute.xlu0 %772
  %774 = vset.pattern.permute.xlu0 0
  %775 = vperm.xlu0 %774, %v753
  %v776 = vpop.permute.xlu0 %775
  %777 = vset.pattern.permute.xlu0 0
  %778 = vperm.xlu0 %777, %v754
  %v779 = vpop.permute.xlu0 %778
  %780 = vset.pattern.permute.xlu0 0
  %781 = vperm.xlu0 %780, %v755
  %v782 = vpop.permute.xlu0 %781
  %783 = vset.pattern.permute.xlu0 0
  %784 = vperm.xlu0 %783, %v756
  %v785 = vpop.permute.xlu0 %784
  %786 = vset.pattern.permute.xlu0 0
  %787 = vperm.xlu0 %786, %v757
  %v788 = vpop.permute.xlu0 %787
  %789 = vset.pattern.permute.xlu0 0
  %790 = vperm.xlu0 %789, %v758
  %v791 = vpop.permute.xlu0 %790
  %792 = vset.pattern.permute.xlu0 0
  %793 = vperm.xlu0 %792, %v759
  %v794 = vpop.permute.xlu0 %793
  %795 = vset.pattern.permute.xlu0 0
  %796 = vperm.xlu0 %795, %v760
  %v797 = vpop.permute.xlu0 %796
  %798 = vset.pattern.permute.xlu0 0
  %799 = vperm.xlu0 %798, %v761
  %v800 = vpop.permute.xlu0 %799
  %801 = vset.pattern.permute.xlu0 0
  %802 = vperm.xlu0 %801, %v762
  %v803 = vpop.permute.xlu0 %802
  %804 = vset.pattern.permute.xlu0 0
  %805 = vperm.xlu0 %804, %v763
  %v806 = vpop.permute.xlu0 %805
  %807 = vset.pattern.permute.xlu0 0
  %808 = vperm.xlu0 %807, %v764
  %v809 = vpop.permute.xlu0 %808
  %810 = vset.pattern.permute.xlu0 0
  %811 = vperm.xlu0 %810, %v765
  %v812 = vpop.permute.xlu0 %811
  %813 = vset.pattern.permute.xlu0 0
  %814 = vperm.xlu0 %813, %v766
  %v815 = vpop.permute.xlu0 %814
  %v816 = vlaneseq
  %v817 = vshrl.u32 %v816, 7
  %v818 = vsub.s32 0, %v817
  %v819 = vrot.slane %v767, %v818
  %vm820 = vcmp.ne.s32.totalorder %v770, %v819
  %vm821 = vcmp.ne.s32.totalorder %v773, %v819
  %vm822 = vcmp.ne.s32.totalorder %v776, %v819
  %vm823 = vcmp.ne.s32.totalorder %v779, %v819
  %vm824 = vcmp.ne.s32.totalorder %v782, %v819
  %vm825 = vcmp.ne.s32.totalorder %v785, %v819
  %vm826 = vcmp.ne.s32.totalorder %v788, %v819
  %vm827 = vcmp.ne.s32.totalorder %v791, %v819
  %vm828 = vcmp.ne.s32.totalorder %v794, %v819
  %vm829 = vcmp.ne.s32.totalorder %v797, %v819
  %vm830 = vcmp.ne.s32.totalorder %v800, %v819
  %vm831 = vcmp.ne.s32.totalorder %v803, %v819
  %vm832 = vcmp.ne.s32.totalorder %v806, %v819
  %vm833 = vcmp.ne.s32.totalorder %v809, %v819
  %vm834 = vcmp.ne.s32.totalorder %v812, %v819
  %vm835 = vcmp.ne.s32.totalorder %v815, %v819
  %vm836 = vmand %vm735, %vm820
  %vm837 = vmand %vm736, %vm821
  %vm838 = vmand %vm737, %vm822
  %vm839 = vmand %vm738, %vm823
  %vm840 = vmand %vm739, %vm824
  %vm841 = vmand %vm740, %vm825
  %vm842 = vmand %vm741, %vm826
  %vm843 = vmand %vm742, %vm827
  %vm844 = vmand %vm743, %vm828
  %vm845 = vmand %vm744, %vm829
  %vm846 = vmand %vm745, %vm830
  %vm847 = vmand %vm746, %vm831
  %vm848 = vmand %vm747, %vm832
  %vm849 = vmand %vm748, %vm833
  %vm850 = vmand %vm749, %vm834
  %vm851 = vmand %vm750, %vm835
  %v852 = vsel %vm836, %v560, -1e+30
  %v853 = vsel %vm837, %v567, -1e+30
  %v854 = vsel %vm838, %v574, -1e+30
  %v855 = vsel %vm839, %v581, -1e+30
  %v856 = vsel %vm840, %v588, -1e+30
  %v857 = vsel %vm841, %v595, -1e+30
  %v858 = vsel %vm842, %v602, -1e+30
  %v859 = vsel %vm843, %v609, -1e+30
  %v860 = vsel %vm844, %v616, -1e+30
  %v861 = vsel %vm845, %v623, -1e+30
  %v862 = vsel %vm846, %v630, -1e+30
  %v863 = vsel %vm847, %v637, -1e+30
  %v864 = vsel %vm848, %v644, -1e+30
  %v865 = vsel %vm849, %v651, -1e+30
  %v866 = vsel %vm850, %v658, -1e+30
  %v867 = vsel %vm851, %v665, -1e+30
  %v868 = vsel %vm735, -1e+30, %v560
  %v869 = vsel %vm736, -1e+30, %v567
  %v870 = vsel %vm737, -1e+30, %v574
  %v871 = vsel %vm738, -1e+30, %v581
  %v872 = vsel %vm739, -1e+30, %v588
  %v873 = vsel %vm740, -1e+30, %v595
  %v874 = vsel %vm741, -1e+30, %v602
  %v875 = vsel %vm742, -1e+30, %v609
  %v876 = vsel %vm743, -1e+30, %v616
  %v877 = vsel %vm744, -1e+30, %v623
  %v878 = vsel %vm745, -1e+30, %v630
  %v879 = vsel %vm746, -1e+30, %v637
  %v880 = vsel %vm747, -1e+30, %v644
  %v881 = vsel %vm748, -1e+30, %v651
  %v882 = vsel %vm749, -1e+30, %v658
  %v883 = vsel %vm750, -1e+30, %v665
  %v884 = vld [vmem:[#allocation2] sm:$0xff]
  %v885 = vld [vmem:[#allocation2 + $0x8] sm:$0xff]
  %v886 = vld [vmem:[#allocation2 + $0x10] sm:$0xff]
  %v887 = vld [vmem:[#allocation2 + $0x18] sm:$0xff]
  %v888 = vld [vmem:[#allocation2 + $0x20] sm:$0xff]
  %v889 = vld [vmem:[#allocation2 + $0x28] sm:$0xff]
  %v890 = vld [vmem:[#allocation2 + $0x30] sm:$0xff]
  %v891 = vld [vmem:[#allocation2 + $0x38] sm:$0xff]
  %v892 = vld [vmem:[#allocation2 + $0x40] sm:$0xff]
  %v893 = vld [vmem:[#allocation2 + $0x48] sm:$0xff]
  %v894 = vld [vmem:[#allocation2 + $0x50] sm:$0xff]
  %v895 = vld [vmem:[#allocation2 + $0x58] sm:$0xff]
  %v896 = vld [vmem:[#allocation2 + $0x60] sm:$0xff]
  %v897 = vld [vmem:[#allocation2 + $0x68] sm:$0xff]
  %v898 = vld [vmem:[#allocation2 + $0x70] sm:$0xff]
  %v899 = vld [vmem:[#allocation2 + $0x78] sm:$0xff]
  %v900 = vmax.f32 %v884, %v852
  %v901 = vmax.f32 %v885, %v853
  %v902 = vmax.f32 %v886, %v854
  %v903 = vmax.f32 %v887, %v855
  %v904 = vmax.f32 %v888, %v856
  %v905 = vmax.f32 %v889, %v857
  %v906 = vmax.f32 %v890, %v858
  %v907 = vmax.f32 %v891, %v859
  %v908 = vmax.f32 %v892, %v860
  %v909 = vmax.f32 %v893, %v861
  %v910 = vmax.f32 %v894, %v862
  %v911 = vmax.f32 %v895, %v863
  %v912 = vmax.f32 %v896, %v864
  %v913 = vmax.f32 %v897, %v865
  %v914 = vmax.f32 %v898, %v866
  %v915 = vmax.f32 %v899, %v867
  %vm916 = vcmp.gt.f32.partialorder %v884, -1e+29
  %vm917 = vcmp.gt.f32.partialorder %v885, -1e+29
  %vm918 = vcmp.gt.f32.partialorder %v886, -1e+29
  %vm919 = vcmp.gt.f32.partialorder %v887, -1e+29
  %vm920 = vcmp.gt.f32.partialorder %v888, -1e+29
  %vm921 = vcmp.gt.f32.partialorder %v889, -1e+29
  %vm922 = vcmp.gt.f32.partialorder %v890, -1e+29
  %vm923 = vcmp.gt.f32.partialorder %v891, -1e+29
  %vm924 = vcmp.gt.f32.partialorder %v892, -1e+29
  %vm925 = vcmp.gt.f32.partialorder %v893, -1e+29
  %vm926 = vcmp.gt.f32.partialorder %v894, -1e+29
  %vm927 = vcmp.gt.f32.partialorder %v895, -1e+29
  %vm928 = vcmp.gt.f32.partialorder %v896, -1e+29
  %vm929 = vcmp.gt.f32.partialorder %v897, -1e+29
  %vm930 = vcmp.gt.f32.partialorder %v898, -1e+29
  %vm931 = vcmp.gt.f32.partialorder %v899, -1e+29
  %v932 = vsel %vm916, %v884, 0.0
  %v933 = vsel %vm917, %v885, 0.0
  %v934 = vsel %vm918, %v886, 0.0
  %v935 = vsel %vm919, %v887, 0.0
  %v936 = vsel %vm920, %v888, 0.0
  %v937 = vsel %vm921, %v889, 0.0
  %v938 = vsel %vm922, %v890, 0.0
  %v939 = vsel %vm923, %v891, 0.0
  %v940 = vsel %vm924, %v892, 0.0
  %v941 = vsel %vm925, %v893, 0.0
  %v942 = vsel %vm926, %v894, 0.0
  %v943 = vsel %vm927, %v895, 0.0
  %v944 = vsel %vm928, %v896, 0.0
  %v945 = vsel %vm929, %v897, 0.0
  %v946 = vsel %vm930, %v898, 0.0
  %v947 = vsel %vm931, %v899, 0.0
  %vm948 = vcmp.gt.f32.partialorder %v900, -1e+29
  %vm949 = vcmp.gt.f32.partialorder %v901, -1e+29
  %vm950 = vcmp.gt.f32.partialorder %v902, -1e+29
  %vm951 = vcmp.gt.f32.partialorder %v903, -1e+29
  %vm952 = vcmp.gt.f32.partialorder %v904, -1e+29
  %vm953 = vcmp.gt.f32.partialorder %v905, -1e+29
  %vm954 = vcmp.gt.f32.partialorder %v906, -1e+29
  %vm955 = vcmp.gt.f32.partialorder %v907, -1e+29
  %vm956 = vcmp.gt.f32.partialorder %v908, -1e+29
  %vm957 = vcmp.gt.f32.partialorder %v909, -1e+29
  %vm958 = vcmp.gt.f32.partialorder %v910, -1e+29
  %vm959 = vcmp.gt.f32.partialorder %v911, -1e+29
  %vm960 = vcmp.gt.f32.partialorder %v912, -1e+29
  %vm961 = vcmp.gt.f32.partialorder %v913, -1e+29
  %vm962 = vcmp.gt.f32.partialorder %v914, -1e+29
  %vm963 = vcmp.gt.f32.partialorder %v915, -1e+29
  %v964 = vsel %vm948, %v900, 0.0
  %v965 = vsel %vm949, %v901, 0.0
  %v966 = vsel %vm950, %v902, 0.0
  %v967 = vsel %vm951, %v903, 0.0
  %v968 = vsel %vm952, %v904, 0.0
  %v969 = vsel %vm953, %v905, 0.0
  %v970 = vsel %vm954, %v906, 0.0
  %v971 = vsel %vm955, %v907, 0.0
  %v972 = vsel %vm956, %v908, 0.0
  %v973 = vsel %vm957, %v909, 0.0
  %v974 = vsel %vm958, %v910, 0.0
  %v975 = vsel %vm959, %v911, 0.0
  %v976 = vsel %vm960, %v912, 0.0
  %v977 = vsel %vm961, %v913, 0.0
  %v978 = vsel %vm962, %v914, 0.0
  %v979 = vsel %vm963, %v915, 0.0
  %v980 = vsub.f32 %v932, %v964
  %v981 = vsub.f32 %v933, %v965
  %v982 = vsub.f32 %v934, %v966
  %v983 = vsub.f32 %v935, %v967
  %v984 = vsub.f32 %v936, %v968
  %v985 = vsub.f32 %v937, %v969
  %v986 = vsub.f32 %v938, %v970
  %v987 = vsub.f32 %v939, %v971
  %v988 = vsub.f32 %v940, %v972
  %v989 = vsub.f32 %v941, %v973
  %v990 = vsub.f32 %v942, %v974
  %v991 = vsub.f32 %v943, %v975
  %v992 = vsub.f32 %v944, %v976
  %v993 = vsub.f32 %v945, %v977
  %v994 = vsub.f32 %v946, %v978
  %v995 = vsub.f32 %v947, %v979
  %v996 = vmul.f32 %v980, 1.442695
  %v997 = vpow.pop %v996
  %v998 = vmul.f32 %v981, 1.442695
  %v999 = vpow.pop %v998
  %v1000 = vmul.f32 %v982, 1.442695
  %v1001 = vpow.pop %v1000
  %v1002 = vmul.f32 %v983, 1.442695
  %v1003 = vpow.pop %v1002
  %v1004 = vmul.f32 %v984, 1.442695
  %v1005 = vpow.pop %v1004
  %v1006 = vmul.f32 %v985, 1.442695
  %v1007 = vpow.pop %v1006
  %v1008 = vmul.f32 %v986, 1.442695
  %v1009 = vpow.pop %v1008
  %v1010 = vmul.f32 %v987, 1.442695
  %v1011 = vpow.pop %v1010
  %v1012 = vmul.f32 %v988, 1.442695
  %v1013 = vpow.pop %v1012
  %v1014 = vmul.f32 %v989, 1.442695
  %v1015 = vpow.pop %v1014
  %v1016 = vmul.f32 %v990, 1.442695
  %v1017 = vpow.pop %v1016
  %v1018 = vmul.f32 %v991, 1.442695
  %v1019 = vpow.pop %v1018
  %v1020 = vmul.f32 %v992, 1.442695
  %v1021 = vpow.pop %v1020
  %v1022 = vmul.f32 %v993, 1.442695
  %v1023 = vpow.pop %v1022
  %v1024 = vmul.f32 %v994, 1.442695
  %v1025 = vpow.pop %v1024
  %v1026 = vmul.f32 %v995, 1.442695
  %v1027 = vpow.pop %v1026
  %1028 = vst [vmem:[#allocation2] sm:$0xff] %v900
  %1029 = vst [vmem:[#allocation2 + $0x8] sm:$0xff] %v901
  %1030 = vst [vmem:[#allocation2 + $0x10] sm:$0xff] %v902
  %1031 = vst [vmem:[#allocation2 + $0x18] sm:$0xff] %v903
  %1032 = vst [vmem:[#allocation2 + $0x20] sm:$0xff] %v904
  %1033 = vst [vmem:[#allocation2 + $0x28] sm:$0xff] %v905
  %1034 = vst [vmem:[#allocation2 + $0x30] sm:$0xff] %v906
  %1035 = vst [vmem:[#allocation2 + $0x38] sm:$0xff] %v907
  %1036 = vst [vmem:[#allocation2 + $0x40] sm:$0xff] %v908
  %1037 = vst [vmem:[#allocation2 + $0x48] sm:$0xff] %v909
  %1038 = vst [vmem:[#allocation2 + $0x50] sm:$0xff] %v910
  %1039 = vst [vmem:[#allocation2 + $0x58] sm:$0xff] %v911
  %1040 = vst [vmem:[#allocation2 + $0x60] sm:$0xff] %v912
  %1041 = vst [vmem:[#allocation2 + $0x68] sm:$0xff] %v913
  %1042 = vst [vmem:[#allocation2 + $0x70] sm:$0xff] %v914
  %1043 = vst [vmem:[#allocation2 + $0x78] sm:$0xff] %v915
  %v1044 = vld [vmem:[#allocation3] sm:$0xff]
  %v1045 = vld [vmem:[#allocation3 + $0x8] sm:$0xff]
  %v1046 = vld [vmem:[#allocation3 + $0x10] sm:$0xff]
  %v1047 = vld [vmem:[#allocation3 + $0x18] sm:$0xff]
  %v1048 = vld [vmem:[#allocation3 + $0x20] sm:$0xff]
  %v1049 = vld [vmem:[#allocation3 + $0x28] sm:$0xff]
  %v1050 = vld [vmem:[#allocation3 + $0x30] sm:$0xff]
  %v1051 = vld [vmem:[#allocation3 + $0x38] sm:$0xff]
  %v1052 = vld [vmem:[#allocation3 + $0x40] sm:$0xff]
  %v1053 = vld [vmem:[#allocation3 + $0x48] sm:$0xff]
  %v1054 = vld [vmem:[#allocation3 + $0x50] sm:$0xff]
  %v1055 = vld [vmem:[#allocation3 + $0x58] sm:$0xff]
  %v1056 = vld [vmem:[#allocation3 + $0x60] sm:$0xff]
  %v1057 = vld [vmem:[#allocation3 + $0x68] sm:$0xff]
  %v1058 = vld [vmem:[#allocation3 + $0x70] sm:$0xff]
  %v1059 = vld [vmem:[#allocation3 + $0x78] sm:$0xff]
  %v1060 = vmul.f32 %v997, %v1044
  %v1061 = vmul.f32 %v999, %v1045
  %v1062 = vmul.f32 %v1001, %v1046
  %v1063 = vmul.f32 %v1003, %v1047
  %v1064 = vmul.f32 %v1005, %v1048
  %v1065 = vmul.f32 %v1007, %v1049
  %v1066 = vmul.f32 %v1009, %v1050
  %v1067 = vmul.f32 %v1011, %v1051
  %v1068 = vmul.f32 %v1013, %v1052
  %v1069 = vmul.f32 %v1015, %v1053
  %v1070 = vmul.f32 %v1017, %v1054
  %v1071 = vmul.f32 %v1019, %v1055
  %v1072 = vmul.f32 %v1021, %v1056
  %v1073 = vmul.f32 %v1023, %v1057
  %v1074 = vmul.f32 %v1025, %v1058
  %v1075 = vmul.f32 %v1027, %v1059
  %v1076 = vld [vmem:[#allocation4] sm:$0xff]
  %v1077 = vld [vmem:[#allocation4 + $0x8] sm:$0xff]
  %v1078 = vld [vmem:[#allocation4 + $0x10] sm:$0xff]
  %v1079 = vld [vmem:[#allocation4 + $0x18] sm:$0xff]
  %v1080 = vld [vmem:[#allocation4 + $0x20] sm:$0xff]
  %v1081 = vld [vmem:[#allocation4 + $0x28] sm:$0xff]
  %v1082 = vld [vmem:[#allocation4 + $0x30] sm:$0xff]
  %v1083 = vld [vmem:[#allocation4 + $0x38] sm:$0xff]
  %v1084 = vld [vmem:[#allocation4 + $0x40] sm:$0xff]
  %v1085 = vld [vmem:[#allocation4 + $0x48] sm:$0xff]
  %v1086 = vld [vmem:[#allocation4 + $0x50] sm:$0xff]
  %v1087 = vld [vmem:[#allocation4 + $0x58] sm:$0xff]
  %v1088 = vld [vmem:[#allocation4 + $0x60] sm:$0xff]
  %v1089 = vld [vmem:[#allocation4 + $0x68] sm:$0xff]
  %v1090 = vld [vmem:[#allocation4 + $0x70] sm:$0xff]
  %v1091 = vld [vmem:[#allocation4 + $0x78] sm:$0xff]
  %v1092 = vmul.f32 %v997, %v1076
  %v1093 = vmul.f32 %v999, %v1077
  %v1094 = vmul.f32 %v1001, %v1078
  %v1095 = vmul.f32 %v1003, %v1079
  %v1096 = vmul.f32 %v1005, %v1080
  %v1097 = vmul.f32 %v1007, %v1081
  %v1098 = vmul.f32 %v1009, %v1082
  %v1099 = vmul.f32 %v1011, %v1083
  %v1100 = vmul.f32 %v1013, %v1084
  %v1101 = vmul.f32 %v1015, %v1085
  %v1102 = vmul.f32 %v1017, %v1086
  %v1103 = vmul.f32 %v1019, %v1087
  %v1104 = vmul.f32 %v1021, %v1088
  %v1105 = vmul.f32 %v1023, %v1089
  %v1106 = vmul.f32 %v1025, %v1090
  %v1107 = vmul.f32 %v1027, %v1091
  %v1108 = vld [vmem:[#allocation5] sm:$0xff]
  %v1109 = vld [vmem:[#allocation5 + $0x8] sm:$0xff]
  %v1110 = vld [vmem:[#allocation5 + $0x10] sm:$0xff]
  %v1111 = vld [vmem:[#allocation5 + $0x18] sm:$0xff]
  %v1112 = vld [vmem:[#allocation5 + $0x20] sm:$0xff]
  %v1113 = vld [vmem:[#allocation5 + $0x28] sm:$0xff]
  %v1114 = vld [vmem:[#allocation5 + $0x30] sm:$0xff]
  %v1115 = vld [vmem:[#allocation5 + $0x38] sm:$0xff]
  %v1116 = vld [vmem:[#allocation5 + $0x40] sm:$0xff]
  %v1117 = vld [vmem:[#allocation5 + $0x48] sm:$0xff]
  %v1118 = vld [vmem:[#allocation5 + $0x50] sm:$0xff]
  %v1119 = vld [vmem:[#allocation5 + $0x58] sm:$0xff]
  %v1120 = vld [vmem:[#allocation5 + $0x60] sm:$0xff]
  %v1121 = vld [vmem:[#allocation5 + $0x68] sm:$0xff]
  %v1122 = vld [vmem:[#allocation5 + $0x70] sm:$0xff]
  %v1123 = vld [vmem:[#allocation5 + $0x78] sm:$0xff]
  %v1124 = vld [vmem:[#allocation6] sm:$0xff]
  %v1125 = vld [vmem:[#allocation6 + $0x8] sm:$0xff]
  %v1126 = vld [vmem:[#allocation6 + $0x10] sm:$0xff]
  %v1127 = vld [vmem:[#allocation6 + $0x18] sm:$0xff]
  %v1128 = vld [vmem:[#allocation6 + $0x20] sm:$0xff]
  %v1129 = vld [vmem:[#allocation6 + $0x28] sm:$0xff]
  %v1130 = vld [vmem:[#allocation6 + $0x30] sm:$0xff]
  %v1131 = vld [vmem:[#allocation6 + $0x38] sm:$0xff]
  %v1132 = vld [vmem:[#allocation6 + $0x40] sm:$0xff]
  %v1133 = vld [vmem:[#allocation6 + $0x48] sm:$0xff]
  %v1134 = vld [vmem:[#allocation6 + $0x50] sm:$0xff]
  %v1135 = vld [vmem:[#allocation6 + $0x58] sm:$0xff]
  %v1136 = vld [vmem:[#allocation6 + $0x60] sm:$0xff]
  %v1137 = vld [vmem:[#allocation6 + $0x68] sm:$0xff]
  %v1138 = vld [vmem:[#allocation6 + $0x70] sm:$0xff]
  %v1139 = vld [vmem:[#allocation6 + $0x78] sm:$0xff]
  %vm1140 = vcmp.gt.f32.partialorder %v852, -1e+29
  %vm1141 = vcmp.gt.f32.partialorder %v853, -1e+29
  %vm1142 = vcmp.gt.f32.partialorder %v854, -1e+29
  %vm1143 = vcmp.gt.f32.partialorder %v855, -1e+29
  %vm1144 = vcmp.gt.f32.partialorder %v856, -1e+29
  %vm1145 = vcmp.gt.f32.partialorder %v857, -1e+29
  %vm1146 = vcmp.gt.f32.partialorder %v858, -1e+29
  %vm1147 = vcmp.gt.f32.partialorder %v859, -1e+29
  %vm1148 = vcmp.gt.f32.partialorder %v860, -1e+29
  %vm1149 = vcmp.gt.f32.partialorder %v861, -1e+29
  %vm1150 = vcmp.gt.f32.partialorder %v862, -1e+29
  %vm1151 = vcmp.gt.f32.partialorder %v863, -1e+29
  %vm1152 = vcmp.gt.f32.partialorder %v864, -1e+29
  %vm1153 = vcmp.gt.f32.partialorder %v865, -1e+29
  %vm1154 = vcmp.gt.f32.partialorder %v866, -1e+29
  %vm1155 = vcmp.gt.f32.partialorder %v867, -1e+29
  %v1156 = vsub.f32 %v852, %v964
  %v1157 = vsub.f32 %v853, %v965
  %v1158 = vsub.f32 %v854, %v966
  %v1159 = vsub.f32 %v855, %v967
  %v1160 = vsub.f32 %v856, %v968
  %v1161 = vsub.f32 %v857, %v969
  %v1162 = vsub.f32 %v858, %v970
  %v1163 = vsub.f32 %v859, %v971
  %v1164 = vsub.f32 %v860, %v972
  %v1165 = vsub.f32 %v861, %v973
  %v1166 = vsub.f32 %v862, %v974
  %v1167 = vsub.f32 %v863, %v975
  %v1168 = vsub.f32 %v864, %v976
  %v1169 = vsub.f32 %v865, %v977
  %v1170 = vsub.f32 %v866, %v978
  %v1171 = vsub.f32 %v867, %v979
  %v1172 = vmul.f32 %v1156, 1.442695
  %v1173 = vpow.pop %v1172
  %v1174 = vmul.f32 %v1157, 1.442695
  %v1175 = vpow.pop %v1174
  %v1176 = vmul.f32 %v1158, 1.442695
  %v1177 = vpow.pop %v1176
  %v1178 = vmul.f32 %v1159, 1.442695
  %v1179 = vpow.pop %v1178
  %v1180 = vmul.f32 %v1160, 1.442695
  %v1181 = vpow.pop %v1180
  %v1182 = vmul.f32 %v1161, 1.442695
  %v1183 = vpow.pop %v1182
  %v1184 = vmul.f32 %v1162, 1.442695
  %v1185 = vpow.pop %v1184
  %v1186 = vmul.f32 %v1163, 1.442695
  %v1187 = vpow.pop %v1186
  %v1188 = vmul.f32 %v1164, 1.442695
  %v1189 = vpow.pop %v1188
  %v1190 = vmul.f32 %v1165, 1.442695
  %v1191 = vpow.pop %v1190
  %v1192 = vmul.f32 %v1166, 1.442695
  %v1193 = vpow.pop %v1192
  %v1194 = vmul.f32 %v1167, 1.442695
  %v1195 = vpow.pop %v1194
  %v1196 = vmul.f32 %v1168, 1.442695
  %v1197 = vpow.pop %v1196
  %v1198 = vmul.f32 %v1169, 1.442695
  %v1199 = vpow.pop %v1198
  %v1200 = vmul.f32 %v1170, 1.442695
  %v1201 = vpow.pop %v1200
  %v1202 = vmul.f32 %v1171, 1.442695
  %v1203 = vpow.pop %v1202
  %v1204 = vsel %vm1140, %v1173, 0.0
  %v1205 = vsel %vm1141, %v1175, 0.0
  %v1206 = vsel %vm1142, %v1177, 0.0
  %v1207 = vsel %vm1143, %v1179, 0.0
  %v1208 = vsel %vm1144, %v1181, 0.0
  %v1209 = vsel %vm1145, %v1183, 0.0
  %v1210 = vsel %vm1146, %v1185, 0.0
  %v1211 = vsel %vm1147, %v1187, 0.0
  %v1212 = vsel %vm1148, %v1189, 0.0
  %v1213 = vsel %vm1149, %v1191, 0.0
  %v1214 = vsel %vm1150, %v1193, 0.0
  %v1215 = vsel %vm1151, %v1195, 0.0
  %v1216 = vsel %vm1152, %v1197, 0.0
  %v1217 = vsel %vm1153, %v1199, 0.0
  %v1218 = vsel %vm1154, %v1201, 0.0
  %v1219 = vsel %vm1155, %v1203, 0.0
  %vm1220 = vcmp.gt.f32.partialorder %v868, -1e+29
  %vm1221 = vcmp.gt.f32.partialorder %v869, -1e+29
  %vm1222 = vcmp.gt.f32.partialorder %v870, -1e+29
  %vm1223 = vcmp.gt.f32.partialorder %v871, -1e+29
  %vm1224 = vcmp.gt.f32.partialorder %v872, -1e+29
  %vm1225 = vcmp.gt.f32.partialorder %v873, -1e+29
  %vm1226 = vcmp.gt.f32.partialorder %v874, -1e+29
  %vm1227 = vcmp.gt.f32.partialorder %v875, -1e+29
  %vm1228 = vcmp.gt.f32.partialorder %v876, -1e+29
  %vm1229 = vcmp.gt.f32.partialorder %v877, -1e+29
  %vm1230 = vcmp.gt.f32.partialorder %v878, -1e+29
  %vm1231 = vcmp.gt.f32.partialorder %v879, -1e+29
  %vm1232 = vcmp.gt.f32.partialorder %v880, -1e+29
  %vm1233 = vcmp.gt.f32.partialorder %v881, -1e+29
  %vm1234 = vcmp.gt.f32.partialorder %v882, -1e+29
  %vm1235 = vcmp.gt.f32.partialorder %v883, -1e+29
  %v1236 = vsub.f32 0.0, %v868
  %v1237 = vsub.f32 0.0, %v869
  %v1238 = vsub.f32 0.0, %v870
  %v1239 = vsub.f32 0.0, %v871
  %v1240 = vsub.f32 0.0, %v872
  %v1241 = vsub.f32 0.0, %v873
  %v1242 = vsub.f32 0.0, %v874
  %v1243 = vsub.f32 0.0, %v875
  %v1244 = vsub.f32 0.0, %v876
  %v1245 = vsub.f32 0.0, %v877
  %v1246 = vsub.f32 0.0, %v878
  %v1247 = vsub.f32 0.0, %v879
  %v1248 = vsub.f32 0.0, %v880
  %v1249 = vsub.f32 0.0, %v881
  %v1250 = vsub.f32 0.0, %v882
  %v1251 = vsub.f32 0.0, %v883
  %v1252 = vmul.f32 %v1236, 1.442695
  %v1253 = vpow.pop %v1252
  %v1254 = vmul.f32 %v1237, 1.442695
  %v1255 = vpow.pop %v1254
  %v1256 = vmul.f32 %v1238, 1.442695
  %v1257 = vpow.pop %v1256
  %v1258 = vmul.f32 %v1239, 1.442695
  %v1259 = vpow.pop %v1258
  %v1260 = vmul.f32 %v1240, 1.442695
  %v1261 = vpow.pop %v1260
  %v1262 = vmul.f32 %v1241, 1.442695
  %v1263 = vpow.pop %v1262
  %v1264 = vmul.f32 %v1242, 1.442695
  %v1265 = vpow.pop %v1264
  %v1266 = vmul.f32 %v1243, 1.442695
  %v1267 = vpow.pop %v1266
  %v1268 = vmul.f32 %v1244, 1.442695
  %v1269 = vpow.pop %v1268
  %v1270 = vmul.f32 %v1245, 1.442695
  %v1271 = vpow.pop %v1270
  %v1272 = vmul.f32 %v1246, 1.442695
  %v1273 = vpow.pop %v1272
  %v1274 = vmul.f32 %v1247, 1.442695
  %v1275 = vpow.pop %v1274
  %v1276 = vmul.f32 %v1248, 1.442695
  %v1277 = vpow.pop %v1276
  %v1278 = vmul.f32 %v1249, 1.442695
  %v1279 = vpow.pop %v1278
  %v1280 = vmul.f32 %v1250, 1.442695
  %v1281 = vpow.pop %v1280
  %v1282 = vmul.f32 %v1251, 1.442695
  %v1283 = vpow.pop %v1282
  %v1284 = vsel %vm1220, %v1253, 0.0
  %v1285 = vsel %vm1221, %v1255, 0.0
  %v1286 = vsel %vm1222, %v1257, 0.0
  %v1287 = vsel %vm1223, %v1259, 0.0
  %v1288 = vsel %vm1224, %v1261, 0.0
  %v1289 = vsel %vm1225, %v1263, 0.0
  %v1290 = vsel %vm1226, %v1265, 0.0
  %v1291 = vsel %vm1227, %v1267, 0.0
  %v1292 = vsel %vm1228, %v1269, 0.0
  %v1293 = vsel %vm1229, %v1271, 0.0
  %v1294 = vsel %vm1230, %v1273, 0.0
  %v1295 = vsel %vm1231, %v1275, 0.0
  %v1296 = vsel %vm1232, %v1277, 0.0
  %v1297 = vsel %vm1233, %v1279, 0.0
  %v1298 = vsel %vm1234, %v1281, 0.0
  %v1299 = vsel %vm1235, %v1283, 0.0
  %v1300 = vadd.f32 %v1060, %v1204
  %v1301 = vadd.f32 %v1061, %v1205
  %v1302 = vadd.f32 %v1062, %v1206
  %v1303 = vadd.f32 %v1063, %v1207
  %v1304 = vadd.f32 %v1064, %v1208
  %v1305 = vadd.f32 %v1065, %v1209
  %v1306 = vadd.f32 %v1066, %v1210
  %v1307 = vadd.f32 %v1067, %v1211
  %v1308 = vadd.f32 %v1068, %v1212
  %v1309 = vadd.f32 %v1069, %v1213
  %v1310 = vadd.f32 %v1070, %v1214
  %v1311 = vadd.f32 %v1071, %v1215
  %v1312 = vadd.f32 %v1072, %v1216
  %v1313 = vadd.f32 %v1073, %v1217
  %v1314 = vadd.f32 %v1074, %v1218
  %v1315 = vadd.f32 %v1075, %v1219
  %v1316 = vmul.f32 %v852, %v1204
  %v1317 = vmul.f32 %v853, %v1205
  %v1318 = vmul.f32 %v854, %v1206
  %v1319 = vmul.f32 %v855, %v1207
  %v1320 = vmul.f32 %v856, %v1208
  %v1321 = vmul.f32 %v857, %v1209
  %v1322 = vmul.f32 %v858, %v1210
  %v1323 = vmul.f32 %v859, %v1211
  %v1324 = vmul.f32 %v860, %v1212
  %v1325 = vmul.f32 %v861, %v1213
  %v1326 = vmul.f32 %v862, %v1214
  %v1327 = vmul.f32 %v863, %v1215
  %v1328 = vmul.f32 %v864, %v1216
  %v1329 = vmul.f32 %v865, %v1217
  %v1330 = vmul.f32 %v866, %v1218
  %v1331 = vmul.f32 %v867, %v1219
  %v1332 = vadd.f32 %v1092, %v1316
  %v1333 = vadd.f32 %v1093, %v1317
  %v1334 = vadd.f32 %v1094, %v1318
  %v1335 = vadd.f32 %v1095, %v1319
  %v1336 = vadd.f32 %v1096, %v1320
  %v1337 = vadd.f32 %v1097, %v1321
  %v1338 = vadd.f32 %v1098, %v1322
  %v1339 = vadd.f32 %v1099, %v1323
  %v1340 = vadd.f32 %v1100, %v1324
  %v1341 = vadd.f32 %v1101, %v1325
  %v1342 = vadd.f32 %v1102, %v1326
  %v1343 = vadd.f32 %v1103, %v1327
  %v1344 = vadd.f32 %v1104, %v1328
  %v1345 = vadd.f32 %v1105, %v1329
  %v1346 = vadd.f32 %v1106, %v1330
  %v1347 = vadd.f32 %v1107, %v1331
  %v1348 = vadd.f32 %v1108, %v1284
  %v1349 = vadd.f32 %v1109, %v1285
  %v1350 = vadd.f32 %v1110, %v1286
  %v1351 = vadd.f32 %v1111, %v1287
  %v1352 = vadd.f32 %v1112, %v1288
  %v1353 = vadd.f32 %v1113, %v1289
  %v1354 = vadd.f32 %v1114, %v1290
  %v1355 = vadd.f32 %v1115, %v1291
  %v1356 = vadd.f32 %v1116, %v1292
  %v1357 = vadd.f32 %v1117, %v1293
  %v1358 = vadd.f32 %v1118, %v1294
  %v1359 = vadd.f32 %v1119, %v1295
  %v1360 = vadd.f32 %v1120, %v1296
  %v1361 = vadd.f32 %v1121, %v1297
  %v1362 = vadd.f32 %v1122, %v1298
  %v1363 = vadd.f32 %v1123, %v1299
  %v1364 = vmul.f32 %v868, %v1284
  %v1365 = vmul.f32 %v869, %v1285
  %v1366 = vmul.f32 %v870, %v1286
  %v1367 = vmul.f32 %v871, %v1287
  %v1368 = vmul.f32 %v872, %v1288
  %v1369 = vmul.f32 %v873, %v1289
  %v1370 = vmul.f32 %v874, %v1290
  %v1371 = vmul.f32 %v875, %v1291
  %v1372 = vmul.f32 %v876, %v1292
  %v1373 = vmul.f32 %v877, %v1293
  %v1374 = vmul.f32 %v878, %v1294
  %v1375 = vmul.f32 %v879, %v1295
  %v1376 = vmul.f32 %v880, %v1296
  %v1377 = vmul.f32 %v881, %v1297
  %v1378 = vmul.f32 %v882, %v1298
  %v1379 = vmul.f32 %v883, %v1299
  %v1380 = vadd.f32 %v1124, %v1364
  %v1381 = vadd.f32 %v1125, %v1365
  %v1382 = vadd.f32 %v1126, %v1366
  %v1383 = vadd.f32 %v1127, %v1367
  %v1384 = vadd.f32 %v1128, %v1368
  %v1385 = vadd.f32 %v1129, %v1369
  %v1386 = vadd.f32 %v1130, %v1370
  %v1387 = vadd.f32 %v1131, %v1371
  %v1388 = vadd.f32 %v1132, %v1372
  %v1389 = vadd.f32 %v1133, %v1373
  %v1390 = vadd.f32 %v1134, %v1374
  %v1391 = vadd.f32 %v1135, %v1375
  %v1392 = vadd.f32 %v1136, %v1376
  %v1393 = vadd.f32 %v1137, %v1377
  %v1394 = vadd.f32 %v1138, %v1378
  %v1395 = vadd.f32 %v1139, %v1379
  %1396 = vst [vmem:[#allocation3] sm:$0xff] %v1300
  %1397 = vst [vmem:[#allocation3 + $0x8] sm:$0xff] %v1301
  %1398 = vst [vmem:[#allocation3 + $0x10] sm:$0xff] %v1302
  %1399 = vst [vmem:[#allocation3 + $0x18] sm:$0xff] %v1303
  %1400 = vst [vmem:[#allocation3 + $0x20] sm:$0xff] %v1304
  %1401 = vst [vmem:[#allocation3 + $0x28] sm:$0xff] %v1305
  %1402 = vst [vmem:[#allocation3 + $0x30] sm:$0xff] %v1306
  %1403 = vst [vmem:[#allocation3 + $0x38] sm:$0xff] %v1307
  %1404 = vst [vmem:[#allocation3 + $0x40] sm:$0xff] %v1308
  %1405 = vst [vmem:[#allocation3 + $0x48] sm:$0xff] %v1309
  %1406 = vst [vmem:[#allocation3 + $0x50] sm:$0xff] %v1310
  %1407 = vst [vmem:[#allocation3 + $0x58] sm:$0xff] %v1311
  %1408 = vst [vmem:[#allocation3 + $0x60] sm:$0xff] %v1312
  %1409 = vst [vmem:[#allocation3 + $0x68] sm:$0xff] %v1313
  %1410 = vst [vmem:[#allocation3 + $0x70] sm:$0xff] %v1314
  %1411 = vst [vmem:[#allocation3 + $0x78] sm:$0xff] %v1315
  %1412 = vst [vmem:[#allocation4] sm:$0xff] %v1332
  %1413 = vst [vmem:[#allocation4 + $0x8] sm:$0xff] %v1333
  %1414 = vst [vmem:[#allocation4 + $0x10] sm:$0xff] %v1334
  %1415 = vst [vmem:[#allocation4 + $0x18] sm:$0xff] %v1335
  %1416 = vst [vmem:[#allocation4 + $0x20] sm:$0xff] %v1336
  %1417 = vst [vmem:[#allocation4 + $0x28] sm:$0xff] %v1337
  %1418 = vst [vmem:[#allocation4 + $0x30] sm:$0xff] %v1338
  %1419 = vst [vmem:[#allocation4 + $0x38] sm:$0xff] %v1339
  %1420 = vst [vmem:[#allocation4 + $0x40] sm:$0xff] %v1340
  %1421 = vst [vmem:[#allocation4 + $0x48] sm:$0xff] %v1341
  %1422 = vst [vmem:[#allocation4 + $0x50] sm:$0xff] %v1342
  %1423 = vst [vmem:[#allocation4 + $0x58] sm:$0xff] %v1343
  %1424 = vst [vmem:[#allocation4 + $0x60] sm:$0xff] %v1344
  %1425 = vst [vmem:[#allocation4 + $0x68] sm:$0xff] %v1345
  %1426 = vst [vmem:[#allocation4 + $0x70] sm:$0xff] %v1346
  %1427 = vst [vmem:[#allocation4 + $0x78] sm:$0xff] %v1347
  %1428 = vst [vmem:[#allocation5] sm:$0xff] %v1348
  %1429 = vst [vmem:[#allocation5 + $0x8] sm:$0xff] %v1349
  %1430 = vst [vmem:[#allocation5 + $0x10] sm:$0xff] %v1350
  %1431 = vst [vmem:[#allocation5 + $0x18] sm:$0xff] %v1351
  %1432 = vst [vmem:[#allocation5 + $0x20] sm:$0xff] %v1352
  %1433 = vst [vmem:[#allocation5 + $0x28] sm:$0xff] %v1353
  %1434 = vst [vmem:[#allocation5 + $0x30] sm:$0xff] %v1354
  %1435 = vst [vmem:[#allocation5 + $0x38] sm:$0xff] %v1355
  %1436 = vst [vmem:[#allocation5 + $0x40] sm:$0xff] %v1356
  %1437 = vst [vmem:[#allocation5 + $0x48] sm:$0xff] %v1357
  %1438 = vst [vmem:[#allocation5 + $0x50] sm:$0xff] %v1358
  %1439 = vst [vmem:[#allocation5 + $0x58] sm:$0xff] %v1359
  %1440 = vst [vmem:[#allocation5 + $0x60] sm:$0xff] %v1360
  %1441 = vst [vmem:[#allocation5 + $0x68] sm:$0xff] %v1361
  %1442 = vst [vmem:[#allocation5 + $0x70] sm:$0xff] %v1362
  %1443 = vst [vmem:[#allocation5 + $0x78] sm:$0xff] %v1363
  %1444 = vst [vmem:[#allocation6] sm:$0xff] %v1380
  %1445 = vst [vmem:[#allocation6 + $0x8] sm:$0xff] %v1381
  %1446 = vst [vmem:[#allocation6 + $0x10] sm:$0xff] %v1382
  %1447 = vst [vmem:[#allocation6 + $0x18] sm:$0xff] %v1383
  %1448 = vst [vmem:[#allocation6 + $0x20] sm:$0xff] %v1384
  %1449 = vst [vmem:[#allocation6 + $0x28] sm:$0xff] %v1385
  %1450 = vst [vmem:[#allocation6 + $0x30] sm:$0xff] %v1386
  %1451 = vst [vmem:[#allocation6 + $0x38] sm:$0xff] %v1387
  %1452 = vst [vmem:[#allocation6 + $0x40] sm:$0xff] %v1388
  %1453 = vst [vmem:[#allocation6 + $0x48] sm:$0xff] %v1389
  %1454 = vst [vmem:[#allocation6 + $0x50] sm:$0xff] %v1390
  %1455 = vst [vmem:[#allocation6 + $0x58] sm:$0xff] %v1391
  %1456 = vst [vmem:[#allocation6 + $0x60] sm:$0xff] %v1392
  %1457 = vst [vmem:[#allocation6 + $0x68] sm:$0xff] %v1393
  %1458 = vst [vmem:[#allocation6 + $0x70] sm:$0xff] %v1394
  %1459 = vst [vmem:[#allocation6 + $0x78] sm:$0xff] %v1395
  // Predicated region
  $region38: #{tpu_custom_call.1} parent=0 // pred_check
    %p1460 = pneg %p29
  $region39: #{tpu_custom_call.1} parent=0 // pred_check_branch
    %1462 = sbr.rel (%p1460) target = $region41
  $region40: #{tpu_custom_call.1} parent=0 // pred_region
    %v1463 = vld [vmem:[#allocation2] sm:$0xff]
    %v1464 = vld [vmem:[#allocation2 + $0x8] sm:$0xff]
    %v1465 = vld [vmem:[#allocation2 + $0x10] sm:$0xff]
    %v1466 = vld [vmem:[#allocation2 + $0x18] sm:$0xff]
    %v1467 = vld [vmem:[#allocation2 + $0x20] sm:$0xff]
    %v1468 = vld [vmem:[#allocation2 + $0x28] sm:$0xff]
    %v1469 = vld [vmem:[#allocation2 + $0x30] sm:$0xff]
    %v1470 = vld [vmem:[#allocation2 + $0x38] sm:$0xff]
    %v1471 = vld [vmem:[#allocation2 + $0x40] sm:$0xff]
    %v1472 = vld [vmem:[#allocation2 + $0x48] sm:$0xff]
    %v1473 = vld [vmem:[#allocation2 + $0x50] sm:$0xff]
    %v1474 = vld [vmem:[#allocation2 + $0x58] sm:$0xff]
    %v1475 = vld [vmem:[#allocation2 + $0x60] sm:$0xff]
    %v1476 = vld [vmem:[#allocation2 + $0x68] sm:$0xff]
    %v1477 = vld [vmem:[#allocation2 + $0x70] sm:$0xff]
    %v1478 = vld [vmem:[#allocation2 + $0x78] sm:$0xff]
    %vm1479 = vcmp.gt.f32.partialorder %v1463, -1e+29
    %vm1480 = vcmp.gt.f32.partialorder %v1464, -1e+29
    %vm1481 = vcmp.gt.f32.partialorder %v1465, -1e+29
    %vm1482 = vcmp.gt.f32.partialorder %v1466, -1e+29
    %vm1483 = vcmp.gt.f32.partialorder %v1467, -1e+29
    %vm1484 = vcmp.gt.f32.partialorder %v1468, -1e+29
    %vm1485 = vcmp.gt.f32.partialorder %v1469, -1e+29
    %vm1486 = vcmp.gt.f32.partialorder %v1470, -1e+29
    %vm1487 = vcmp.gt.f32.partialorder %v1471, -1e+29
    %vm1488 = vcmp.gt.f32.partialorder %v1472, -1e+29
    %vm1489 = vcmp.gt.f32.partialorder %v1473, -1e+29
    %vm1490 = vcmp.gt.f32.partialorder %v1474, -1e+29
    %vm1491 = vcmp.gt.f32.partialorder %v1475, -1e+29
    %vm1492 = vcmp.gt.f32.partialorder %v1476, -1e+29
    %vm1493 = vcmp.gt.f32.partialorder %v1477, -1e+29
    %vm1494 = vcmp.gt.f32.partialorder %v1478, -1e+29
    %v1495 = vsel %vm1479, %v1463, 0.0
    %v1496 = vsel %vm1480, %v1464, 0.0
    %v1497 = vsel %vm1481, %v1465, 0.0
    %v1498 = vsel %vm1482, %v1466, 0.0
    %v1499 = vsel %vm1483, %v1467, 0.0
    %v1500 = vsel %vm1484, %v1468, 0.0
    %v1501 = vsel %vm1485, %v1469, 0.0
    %v1502 = vsel %vm1486, %v1470, 0.0
    %v1503 = vsel %vm1487, %v1471, 0.0
    %v1504 = vsel %vm1488, %v1472, 0.0
    %v1505 = vsel %vm1489, %v1473, 0.0
    %v1506 = vsel %vm1490, %v1474, 0.0
    %v1507 = vsel %vm1491, %v1475, 0.0
    %v1508 = vsel %vm1492, %v1476, 0.0
    %v1509 = vsel %vm1493, %v1477, 0.0
    %v1510 = vsel %vm1494, %v1478, 0.0
    %1511 = vmax.xlane.f32.xlu0 %v1463
    %v1512 = vpop.xlane.xlu0 %1511
    %1513 = vmax.xlane.f32.xlu0 %v1464
    %v1514 = vpop.xlane.xlu0 %1513
    %1515 = vmax.xlane.f32.xlu0 %v1465
    %v1516 = vpop.xlane.xlu0 %1515
    %1517 = vmax.xlane.f32.xlu0 %v1466
    %v1518 = vpop.xlane.xlu0 %1517
    %1519 = vmax.xlane.f32.xlu0 %v1467
    %v1520 = vpop.xlane.xlu0 %1519
    %1521 = vmax.xlane.f32.xlu0 %v1468
    %v1522 = vpop.xlane.xlu0 %1521
    %1523 = vmax.xlane.f32.xlu0 %v1469
    %v1524 = vpop.xlane.xlu0 %1523
    %1525 = vmax.xlane.f32.xlu0 %v1470
    %v1526 = vpop.xlane.xlu0 %1525
    %1527 = vmax.xlane.f32.xlu0 %v1471
    %v1528 = vpop.xlane.xlu0 %1527
    %1529 = vmax.xlane.f32.xlu0 %v1472
    %v1530 = vpop.xlane.xlu0 %1529
    %1531 = vmax.xlane.f32.xlu0 %v1473
    %v1532 = vpop.xlane.xlu0 %1531
    %1533 = vmax.xlane.f32.xlu0 %v1474
    %v1534 = vpop.xlane.xlu0 %1533
    %1535 = vmax.xlane.f32.xlu0 %v1475
    %v1536 = vpop.xlane.xlu0 %1535
    %1537 = vmax.xlane.f32.xlu0 %v1476
    %v1538 = vpop.xlane.xlu0 %1537
    %1539 = vmax.xlane.f32.xlu0 %v1477
    %v1540 = vpop.xlane.xlu0 %1539
    %1541 = vmax.xlane.f32.xlu0 %v1478
    %v1542 = vpop.xlane.xlu0 %1541
    %vm1543 = vcmp.gt.f32.partialorder %v1512, -1e+29
    %vm1544 = vcmp.gt.f32.partialorder %v1514, -1e+29
    %vm1545 = vcmp.gt.f32.partialorder %v1516, -1e+29
    %vm1546 = vcmp.gt.f32.partialorder %v1518, -1e+29
    %vm1547 = vcmp.gt.f32.partialorder %v1520, -1e+29
    %vm1548 = vcmp.gt.f32.partialorder %v1522, -1e+29
    %vm1549 = vcmp.gt.f32.partialorder %v1524, -1e+29
    %vm1550 = vcmp.gt.f32.partialorder %v1526, -1e+29
    %vm1551 = vcmp.gt.f32.partialorder %v1528, -1e+29
    %vm1552 = vcmp.gt.f32.partialorder %v1530, -1e+29
    %vm1553 = vcmp.gt.f32.partialorder %v1532, -1e+29
    %vm1554 = vcmp.gt.f32.partialorder %v1534, -1e+29
    %vm1555 = vcmp.gt.f32.partialorder %v1536, -1e+29
    %vm1556 = vcmp.gt.f32.partialorder %v1538, -1e+29
    %vm1557 = vcmp.gt.f32.partialorder %v1540, -1e+29
    %vm1558 = vcmp.gt.f32.partialorder %v1542, -1e+29
    %v1559 = vsel %vm1543, %v1512, 0.0
    %v1560 = vsel %vm1544, %v1514, 0.0
    %v1561 = vsel %vm1545, %v1516, 0.0
    %v1562 = vsel %vm1546, %v1518, 0.0
    %v1563 = vsel %vm1547, %v1520, 0.0
    %v1564 = vsel %vm1548, %v1522, 0.0
    %v1565 = vsel %vm1549, %v1524, 0.0
    %v1566 = vsel %vm1550, %v1526, 0.0
    %v1567 = vsel %vm1551, %v1528, 0.0
    %v1568 = vsel %vm1552, %v1530, 0.0
    %v1569 = vsel %vm1553, %v1532, 0.0
    %v1570 = vsel %vm1554, %v1534, 0.0
    %v1571 = vsel %vm1555, %v1536, 0.0
    %v1572 = vsel %vm1556, %v1538, 0.0
    %v1573 = vsel %vm1557, %v1540, 0.0
    %v1574 = vsel %vm1558, %v1542, 0.0
    %v1575 = vsub.f32 %v1495, %v1559
    %v1576 = vsub.f32 %v1496, %v1560
    %v1577 = vsub.f32 %v1497, %v1561
    %v1578 = vsub.f32 %v1498, %v1562
    %v1579 = vsub.f32 %v1499, %v1563
    %v1580 = vsub.f32 %v1500, %v1564
    %v1581 = vsub.f32 %v1501, %v1565
    %v1582 = vsub.f32 %v1502, %v1566
    %v1583 = vsub.f32 %v1503, %v1567
    %v1584 = vsub.f32 %v1504, %v1568
    %v1585 = vsub.f32 %v1505, %v1569
    %v1586 = vsub.f32 %v1506, %v1570
    %v1587 = vsub.f32 %v1507, %v1571
    %v1588 = vsub.f32 %v1508, %v1572
    %v1589 = vsub.f32 %v1509, %v1573
    %v1590 = vsub.f32 %v1510, %v1574
    %v1591 = vmul.f32 %v1575, 1.442695
    %v1592 = vpow.pop %v1591
    %v1593 = vmul.f32 %v1576, 1.442695
    %v1594 = vpow.pop %v1593
    %v1595 = vmul.f32 %v1577, 1.442695
    %v1596 = vpow.pop %v1595
    %v1597 = vmul.f32 %v1578, 1.442695
    %v1598 = vpow.pop %v1597
    %v1599 = vmul.f32 %v1579, 1.442695
    %v1600 = vpow.pop %v1599
    %v1601 = vmul.f32 %v1580, 1.442695
    %v1602 = vpow.pop %v1601
    %v1603 = vmul.f32 %v1581, 1.442695
    %v1604 = vpow.pop %v1603
    %v1605 = vmul.f32 %v1582, 1.442695
    %v1606 = vpow.pop %v1605
    %v1607 = vmul.f32 %v1583, 1.442695
    %v1608 = vpow.pop %v1607
    %v1609 = vmul.f32 %v1584, 1.442695
    %v1610 = vpow.pop %v1609
    %v1611 = vmul.f32 %v1585, 1.442695
    %v1612 = vpow.pop %v1611
    %v1613 = vmul.f32 %v1586, 1.442695
    %v1614 = vpow.pop %v1613
    %v1615 = vmul.f32 %v1587, 1.442695
    %v1616 = vpow.pop %v1615
    %v1617 = vmul.f32 %v1588, 1.442695
    %v1618 = vpow.pop %v1617
    %v1619 = vmul.f32 %v1589, 1.442695
    %v1620 = vpow.pop %v1619
    %v1621 = vmul.f32 %v1590, 1.442695
    %v1622 = vpow.pop %v1621
    %v1623 = vld [vmem:[#allocation3] sm:$0xff]
    %v1624 = vld [vmem:[#allocation3 + $0x8] sm:$0xff]
    %v1625 = vld [vmem:[#allocation3 + $0x10] sm:$0xff]
    %v1626 = vld [vmem:[#allocation3 + $0x18] sm:$0xff]
    %v1627 = vld [vmem:[#allocation3 + $0x20] sm:$0xff]
    %v1628 = vld [vmem:[#allocation3 + $0x28] sm:$0xff]
    %v1629 = vld [vmem:[#allocation3 + $0x30] sm:$0xff]
    %v1630 = vld [vmem:[#allocation3 + $0x38] sm:$0xff]
    %v1631 = vld [vmem:[#allocation3 + $0x40] sm:$0xff]
    %v1632 = vld [vmem:[#allocation3 + $0x48] sm:$0xff]
    %v1633 = vld [vmem:[#allocation3 + $0x50] sm:$0xff]
    %v1634 = vld [vmem:[#allocation3 + $0x58] sm:$0xff]
    %v1635 = vld [vmem:[#allocation3 + $0x60] sm:$0xff]
    %v1636 = vld [vmem:[#allocation3 + $0x68] sm:$0xff]
    %v1637 = vld [vmem:[#allocation3 + $0x70] sm:$0xff]
    %v1638 = vld [vmem:[#allocation3 + $0x78] sm:$0xff]
    %v1639 = vmul.f32 %v1592, %v1623
    %v1640 = vmul.f32 %v1594, %v1624
    %v1641 = vmul.f32 %v1596, %v1625
    %v1642 = vmul.f32 %v1598, %v1626
    %v1643 = vmul.f32 %v1600, %v1627
    %v1644 = vmul.f32 %v1602, %v1628
    %v1645 = vmul.f32 %v1604, %v1629
    %v1646 = vmul.f32 %v1606, %v1630
    %v1647 = vmul.f32 %v1608, %v1631
    %v1648 = vmul.f32 %v1610, %v1632
    %v1649 = vmul.f32 %v1612, %v1633
    %v1650 = vmul.f32 %v1614, %v1634
    %v1651 = vmul.f32 %v1616, %v1635
    %v1652 = vmul.f32 %v1618, %v1636
    %v1653 = vmul.f32 %v1620, %v1637
    %v1654 = vmul.f32 %v1622, %v1638
    %1655 = vadd.xlane.f32.xlu0 %v1639
    %v1656 = vpop.xlane.xlu0 %1655
    %1657 = vadd.xlane.f32.xlu0 %v1640
    %v1658 = vpop.xlane.xlu0 %1657
    %1659 = vadd.xlane.f32.xlu0 %v1641
    %v1660 = vpop.xlane.xlu0 %1659
    %1661 = vadd.xlane.f32.xlu0 %v1642
    %v1662 = vpop.xlane.xlu0 %1661
    %1663 = vadd.xlane.f32.xlu0 %v1643
    %v1664 = vpop.xlane.xlu0 %1663
    %1665 = vadd.xlane.f32.xlu0 %v1644
    %v1666 = vpop.xlane.xlu0 %1665
    %1667 = vadd.xlane.f32.xlu0 %v1645
    %v1668 = vpop.xlane.xlu0 %1667
    %1669 = vadd.xlane.f32.xlu0 %v1646
    %v1670 = vpop.xlane.xlu0 %1669
    %1671 = vadd.xlane.f32.xlu0 %v1647
    %v1672 = vpop.xlane.xlu0 %1671
    %1673 = vadd.xlane.f32.xlu0 %v1648
    %v1674 = vpop.xlane.xlu0 %1673
    %1675 = vadd.xlane.f32.xlu0 %v1649
    %v1676 = vpop.xlane.xlu0 %1675
    %1677 = vadd.xlane.f32.xlu0 %v1650
    %v1678 = vpop.xlane.xlu0 %1677
    %1679 = vadd.xlane.f32.xlu0 %v1651
    %v1680 = vpop.xlane.xlu0 %1679
    %1681 = vadd.xlane.f32.xlu0 %v1652
    %v1682 = vpop.xlane.xlu0 %1681
    %1683 = vadd.xlane.f32.xlu0 %v1653
    %v1684 = vpop.xlane.xlu0 %1683
    %1685 = vadd.xlane.f32.xlu0 %v1654
    %v1686 = vpop.xlane.xlu0 %1685
    %v1687 = vld [vmem:[#allocation4] sm:$0xff]
    %v1688 = vld [vmem:[#allocation4 + $0x8] sm:$0xff]
    %v1689 = vld [vmem:[#allocation4 + $0x10] sm:$0xff]
    %v1690 = vld [vmem:[#allocation4 + $0x18] sm:$0xff]
    %v1691 = vld [vmem:[#allocation4 + $0x20] sm:$0xff]
    %v1692 = vld [vmem:[#allocation4 + $0x28] sm:$0xff]
    %v1693 = vld [vmem:[#allocation4 + $0x30] sm:$0xff]
    %v1694 = vld [vmem:[#allocation4 + $0x38] sm:$0xff]
    %v1695 = vld [vmem:[#allocation4 + $0x40] sm:$0xff]
    %v1696 = vld [vmem:[#allocation4 + $0x48] sm:$0xff]
    %v1697 = vld [vmem:[#allocation4 + $0x50] sm:$0xff]
    %v1698 = vld [vmem:[#allocation4 + $0x58] sm:$0xff]
    %v1699 = vld [vmem:[#allocation4 + $0x60] sm:$0xff]
    %v1700 = vld [vmem:[#allocation4 + $0x68] sm:$0xff]
    %v1701 = vld [vmem:[#allocation4 + $0x70] sm:$0xff]
    %v1702 = vld [vmem:[#allocation4 + $0x78] sm:$0xff]
    %v1703 = vmul.f32 %v1592, %v1687
    %v1704 = vmul.f32 %v1594, %v1688
    %v1705 = vmul.f32 %v1596, %v1689
    %v1706 = vmul.f32 %v1598, %v1690
    %v1707 = vmul.f32 %v1600, %v1691
    %v1708 = vmul.f32 %v1602, %v1692
    %v1709 = vmul.f32 %v1604, %v1693
    %v1710 = vmul.f32 %v1606, %v1694
    %v1711 = vmul.f32 %v1608, %v1695
    %v1712 = vmul.f32 %v1610, %v1696
    %v1713 = vmul.f32 %v1612, %v1697
    %v1714 = vmul.f32 %v1614, %v1698
    %v1715 = vmul.f32 %v1616, %v1699
    %v1716 = vmul.f32 %v1618, %v1700
    %v1717 = vmul.f32 %v1620, %v1701
    %v1718 = vmul.f32 %v1622, %v1702
    %1719 = vadd.xlane.f32.xlu0 %v1703
    %v1720 = vpop.xlane.xlu0 %1719
    %1721 = vadd.xlane.f32.xlu0 %v1704
    %v1722 = vpop.xlane.xlu0 %1721
    %1723 = vadd.xlane.f32.xlu0 %v1705
    %v1724 = vpop.xlane.xlu0 %1723
    %1725 = vadd.xlane.f32.xlu0 %v1706
    %v1726 = vpop.xlane.xlu0 %1725
    %1727 = vadd.xlane.f32.xlu0 %v1707
    %v1728 = vpop.xlane.xlu0 %1727
    %1729 = vadd.xlane.f32.xlu0 %v1708
    %v1730 = vpop.xlane.xlu0 %1729
    %1731 = vadd.xlane.f32.xlu0 %v1709
    %v1732 = vpop.xlane.xlu0 %1731
    %1733 = vadd.xlane.f32.xlu0 %v1710
    %v1734 = vpop.xlane.xlu0 %1733
    %1735 = vadd.xlane.f32.xlu0 %v1711
    %v1736 = vpop.xlane.xlu0 %1735
    %1737 = vadd.xlane.f32.xlu0 %v1712
    %v1738 = vpop.xlane.xlu0 %1737
    %1739 = vadd.xlane.f32.xlu0 %v1713
    %v1740 = vpop.xlane.xlu0 %1739
    %1741 = vadd.xlane.f32.xlu0 %v1714
    %v1742 = vpop.xlane.xlu0 %1741
    %1743 = vadd.xlane.f32.xlu0 %v1715
    %v1744 = vpop.xlane.xlu0 %1743
    %1745 = vadd.xlane.f32.xlu0 %v1716
    %v1746 = vpop.xlane.xlu0 %1745
    %1747 = vadd.xlane.f32.xlu0 %v1717
    %v1748 = vpop.xlane.xlu0 %1747
    %1749 = vadd.xlane.f32.xlu0 %v1718
    %v1750 = vpop.xlane.xlu0 %1749
    %v1751 = vld [vmem:[#allocation5] sm:$0xff]
    %v1752 = vld [vmem:[#allocation5 + $0x8] sm:$0xff]
    %v1753 = vld [vmem:[#allocation5 + $0x10] sm:$0xff]
    %v1754 = vld [vmem:[#allocation5 + $0x18] sm:$0xff]
    %v1755 = vld [vmem:[#allocation5 + $0x20] sm:$0xff]
    %v1756 = vld [vmem:[#allocation5 + $0x28] sm:$0xff]
    %v1757 = vld [vmem:[#allocation5 + $0x30] sm:$0xff]
    %v1758 = vld [vmem:[#allocation5 + $0x38] sm:$0xff]
    %v1759 = vld [vmem:[#allocation5 + $0x40] sm:$0xff]
    %v1760 = vld [vmem:[#allocation5 + $0x48] sm:$0xff]
    %v1761 = vld [vmem:[#allocation5 + $0x50] sm:$0xff]
    %v1762 = vld [vmem:[#allocation5 + $0x58] sm:$0xff]
    %v1763 = vld [vmem:[#allocation5 + $0x60] sm:$0xff]
    %v1764 = vld [vmem:[#allocation5 + $0x68] sm:$0xff]
    %v1765 = vld [vmem:[#allocation5 + $0x70] sm:$0xff]
    %v1766 = vld [vmem:[#allocation5 + $0x78] sm:$0xff]
    %1767 = vadd.xlane.f32.xlu0 %v1751
    %v1768 = vpop.xlane.xlu0 %1767
    %1769 = vadd.xlane.f32.xlu0 %v1752
    %v1770 = vpop.xlane.xlu0 %1769
    %1771 = vadd.xlane.f32.xlu0 %v1753
    %v1772 = vpop.xlane.xlu0 %1771
    %1773 = vadd.xlane.f32.xlu0 %v1754
    %v1774 = vpop.xlane.xlu0 %1773
    %1775 = vadd.xlane.f32.xlu0 %v1755
    %v1776 = vpop.xlane.xlu0 %1775
    %1777 = vadd.xlane.f32.xlu0 %v1756
    %v1778 = vpop.xlane.xlu0 %1777
    %1779 = vadd.xlane.f32.xlu0 %v1757
    %v1780 = vpop.xlane.xlu0 %1779
    %1781 = vadd.xlane.f32.xlu0 %v1758
    %v1782 = vpop.xlane.xlu0 %1781
    %1783 = vadd.xlane.f32.xlu0 %v1759
    %v1784 = vpop.xlane.xlu0 %1783
    %1785 = vadd.xlane.f32.xlu0 %v1760
    %v1786 = vpop.xlane.xlu0 %1785
    %1787 = vadd.xlane.f32.xlu0 %v1761
    %v1788 = vpop.xlane.xlu0 %1787
    %1789 = vadd.xlane.f32.xlu0 %v1762
    %v1790 = vpop.xlane.xlu0 %1789
    %1791 = vadd.xlane.f32.xlu0 %v1763
    %v1792 = vpop.xlane.xlu0 %1791
    %1793 = vadd.xlane.f32.xlu0 %v1764
    %v1794 = vpop.xlane.xlu0 %1793
    %1795 = vadd.xlane.f32.xlu0 %v1765
    %v1796 = vpop.xlane.xlu0 %1795
    %1797 = vadd.xlane.f32.xlu0 %v1766
    %v1798 = vpop.xlane.xlu0 %1797
    %v1799 = vld [vmem:[#allocation6] sm:$0xff]
    %v1800 = vld [vmem:[#allocation6 + $0x8] sm:$0xff]
    %v1801 = vld [vmem:[#allocation6 + $0x10] sm:$0xff]
    %v1802 = vld [vmem:[#allocation6 + $0x18] sm:$0xff]
    %v1803 = vld [vmem:[#allocation6 + $0x20] sm:$0xff]
    %v1804 = vld [vmem:[#allocation6 + $0x28] sm:$0xff]
    %v1805 = vld [vmem:[#allocation6 + $0x30] sm:$0xff]
    %v1806 = vld [vmem:[#allocation6 + $0x38] sm:$0xff]
    %v1807 = vld [vmem:[#allocation6 + $0x40] sm:$0xff]
    %v1808 = vld [vmem:[#allocation6 + $0x48] sm:$0xff]
    %v1809 = vld [vmem:[#allocation6 + $0x50] sm:$0xff]
    %v1810 = vld [vmem:[#allocation6 + $0x58] sm:$0xff]
    %v1811 = vld [vmem:[#allocation6 + $0x60] sm:$0xff]
    %v1812 = vld [vmem:[#allocation6 + $0x68] sm:$0xff]
    %v1813 = vld [vmem:[#allocation6 + $0x70] sm:$0xff]
    %v1814 = vld [vmem:[#allocation6 + $0x78] sm:$0xff]
    %1815 = vadd.xlane.f32.xlu0 %v1799
    %v1816 = vpop.xlane.xlu0 %1815
    %1817 = vadd.xlane.f32.xlu0 %v1800
    %v1818 = vpop.xlane.xlu0 %1817
    %1819 = vadd.xlane.f32.xlu0 %v1801
    %v1820 = vpop.xlane.xlu0 %1819
    %1821 = vadd.xlane.f32.xlu0 %v1802
    %v1822 = vpop.xlane.xlu0 %1821
    %1823 = vadd.xlane.f32.xlu0 %v1803
    %v1824 = vpop.xlane.xlu0 %1823
    %1825 = vadd.xlane.f32.xlu0 %v1804
    %v1826 = vpop.xlane.xlu0 %1825
    %1827 = vadd.xlane.f32.xlu0 %v1805
    %v1828 = vpop.xlane.xlu0 %1827
    %1829 = vadd.xlane.f32.xlu0 %v1806
    %v1830 = vpop.xlane.xlu0 %1829
    %1831 = vadd.xlane.f32.xlu0 %v1807
    %v1832 = vpop.xlane.xlu0 %1831
    %1833 = vadd.xlane.f32.xlu0 %v1808
    %v1834 = vpop.xlane.xlu0 %1833
    %1835 = vadd.xlane.f32.xlu0 %v1809
    %v1836 = vpop.xlane.xlu0 %1835
    %1837 = vadd.xlane.f32.xlu0 %v1810
    %v1838 = vpop.xlane.xlu0 %1837
    %1839 = vadd.xlane.f32.xlu0 %v1811
    %v1840 = vpop.xlane.xlu0 %1839
    %1841 = vadd.xlane.f32.xlu0 %v1812
    %v1842 = vpop.xlane.xlu0 %1841
    %1843 = vadd.xlane.f32.xlu0 %v1813
    %v1844 = vpop.xlane.xlu0 %1843
    %1845 = vadd.xlane.f32.xlu0 %v1814
    %v1846 = vpop.xlane.xlu0 %1845
    %v1847 = vrcp.pop %v1656
    %v1848 = vmul.f32 %v1720, %v1847
    %v1849 = vrcp.pop %v1658
    %v1850 = vmul.f32 %v1722, %v1849
    %v1851 = vrcp.pop %v1660
    %v1852 = vmul.f32 %v1724, %v1851
    %v1853 = vrcp.pop %v1662
    %v1854 = vmul.f32 %v1726, %v1853
    %v1855 = vrcp.pop %v1664
    %v1856 = vmul.f32 %v1728, %v1855
    %v1857 = vrcp.pop %v1666
    %v1858 = vmul.f32 %v1730, %v1857
    %v1859 = vrcp.pop %v1668
    %v1860 = vmul.f32 %v1732, %v1859
    %v1861 = vrcp.pop %v1670
    %v1862 = vmul.f32 %v1734, %v1861
    %v1863 = vrcp.pop %v1672
    %v1864 = vmul.f32 %v1736, %v1863
    %v1865 = vrcp.pop %v1674
    %v1866 = vmul.f32 %v1738, %v1865
    %v1867 = vrcp.pop %v1676
    %v1868 = vmul.f32 %v1740, %v1867
    %v1869 = vrcp.pop %v1678
    %v1870 = vmul.f32 %v1742, %v1869
    %v1871 = vrcp.pop %v1680
    %v1872 = vmul.f32 %v1744, %v1871
    %v1873 = vrcp.pop %v1682
    %v1874 = vmul.f32 %v1746, %v1873
    %v1875 = vrcp.pop %v1684
    %v1876 = vmul.f32 %v1748, %v1875
    %v1877 = vrcp.pop %v1686
    %v1878 = vmul.f32 %v1750, %v1877
    %v1879 = vrcp.pop %v1768
    %v1880 = vmul.f32 %v1816, %v1879
    %v1881 = vrcp.pop %v1770
    %v1882 = vmul.f32 %v1818, %v1881
    %v1883 = vrcp.pop %v1772
    %v1884 = vmul.f32 %v1820, %v1883
    %v1885 = vrcp.pop %v1774
    %v1886 = vmul.f32 %v1822, %v1885
    %v1887 = vrcp.pop %v1776
    %v1888 = vmul.f32 %v1824, %v1887
    %v1889 = vrcp.pop %v1778
    %v1890 = vmul.f32 %v1826, %v1889
    %v1891 = vrcp.pop %v1780
    %v1892 = vmul.f32 %v1828, %v1891
    %v1893 = vrcp.pop %v1782
    %v1894 = vmul.f32 %v1830, %v1893
    %v1895 = vrcp.pop %v1784
    %v1896 = vmul.f32 %v1832, %v1895
    %v1897 = vrcp.pop %v1786
    %v1898 = vmul.f32 %v1834, %v1897
    %v1899 = vrcp.pop %v1788
    %v1900 = vmul.f32 %v1836, %v1899
    %v1901 = vrcp.pop %v1790
    %v1902 = vmul.f32 %v1838, %v1901
    %v1903 = vrcp.pop %v1792
    %v1904 = vmul.f32 %v1840, %v1903
    %v1905 = vrcp.pop %v1794
    %v1906 = vmul.f32 %v1842, %v1905
    %v1907 = vrcp.pop %v1796
    %v1908 = vmul.f32 %v1844, %v1907
    %v1909 = vrcp.pop %v1798
    %v1910 = vmul.f32 %v1846, %v1909
    %v1911 = vsub.f32 %v1848, %v1880
    %v1912 = vsub.f32 %v1850, %v1882
    %v1913 = vsub.f32 %v1852, %v1884
    %v1914 = vsub.f32 %v1854, %v1886
    %v1915 = vsub.f32 %v1856, %v1888
    %v1916 = vsub.f32 %v1858, %v1890
    %v1917 = vsub.f32 %v1860, %v1892
    %v1918 = vsub.f32 %v1862, %v1894
    %v1919 = vsub.f32 %v1864, %v1896
    %v1920 = vsub.f32 %v1866, %v1898
    %v1921 = vsub.f32 %v1868, %v1900
    %v1922 = vsub.f32 %v1870, %v1902
    %v1923 = vsub.f32 %v1872, %v1904
    %v1924 = vsub.f32 %v1874, %v1906
    %v1925 = vsub.f32 %v1876, %v1908
    %v1926 = vsub.f32 %v1878, %v1910
    %v1927 = vmax.f32 %v1911, 0.0
    %v1928 = vmax.f32 %v1912, 0.0
    %v1929 = vmax.f32 %v1913, 0.0
    %v1930 = vmax.f32 %v1914, 0.0
    %v1931 = vmax.f32 %v1915, 0.0
    %v1932 = vmax.f32 %v1916, 0.0
    %v1933 = vmax.f32 %v1917, 0.0
    %v1934 = vmax.f32 %v1918, 0.0
    %v1935 = vmax.f32 %v1919, 0.0
    %v1936 = vmax.f32 %v1920, 0.0
    %v1937 = vmax.f32 %v1921, 0.0
    %v1938 = vmax.f32 %v1922, 0.0
    %v1939 = vmax.f32 %v1923, 0.0
    %v1940 = vmax.f32 %v1924, 0.0
    %v1941 = vmax.f32 %v1925, 0.0
    %v1942 = vmax.f32 %v1926, 0.0
    %v1943 = vsub.f32 0.0, %v1911
    %v1944 = vsub.f32 0.0, %v1912
    %v1945 = vsub.f32 0.0, %v1913
    %v1946 = vsub.f32 0.0, %v1914
    %v1947 = vsub.f32 0.0, %v1915
    %v1948 = vsub.f32 0.0, %v1916
    %v1949 = vsub.f32 0.0, %v1917
    %v1950 = vsub.f32 0.0, %v1918
    %v1951 = vsub.f32 0.0, %v1919
    %v1952 = vsub.f32 0.0, %v1920
    %v1953 = vsub.f32 0.0, %v1921
    %v1954 = vsub.f32 0.0, %v1922
    %v1955 = vsub.f32 0.0, %v1923
    %v1956 = vsub.f32 0.0, %v1924
    %v1957 = vsub.f32 0.0, %v1925
    %v1958 = vsub.f32 0.0, %v1926
    %vm1959 = vcmp.ne.f32.partialorder %v1943, %v1943
    %vm1960 = vcmp.ne.f32.partialorder %v1944, %v1944
    %vm1961 = vcmp.ne.f32.partialorder %v1945, %v1945
    %vm1962 = vcmp.ne.f32.partialorder %v1946, %v1946
    %vm1963 = vcmp.ne.f32.partialorder %v1947, %v1947
    %vm1964 = vcmp.ne.f32.partialorder %v1948, %v1948
    %vm1965 = vcmp.ne.f32.partialorder %v1949, %v1949
    %vm1966 = vcmp.ne.f32.partialorder %v1950, %v1950
    %vm1967 = vcmp.ne.f32.partialorder %v1951, %v1951
    %vm1968 = vcmp.ne.f32.partialorder %v1952, %v1952
    %vm1969 = vcmp.ne.f32.partialorder %v1953, %v1953
    %vm1970 = vcmp.ne.f32.partialorder %v1954, %v1954
    %vm1971 = vcmp.ne.f32.partialorder %v1955, %v1955
    %vm1972 = vcmp.ne.f32.partialorder %v1956, %v1956
    %vm1973 = vcmp.ne.f32.partialorder %v1957, %v1957
    %vm1974 = vcmp.ne.f32.partialorder %v1958, %v1958
    %v1975 = vadd.f32 %v1911, 0.0
    %v1976 = vadd.f32 %v1912, 0.0
    %v1977 = vadd.f32 %v1913, 0.0
    %v1978 = vadd.f32 %v1914, 0.0
    %v1979 = vadd.f32 %v1915, 0.0
    %v1980 = vadd.f32 %v1916, 0.0
    %v1981 = vadd.f32 %v1917, 0.0
    %v1982 = vadd.f32 %v1918, 0.0
    %v1983 = vadd.f32 %v1919, 0.0
    %v1984 = vadd.f32 %v1920, 0.0
    %v1985 = vadd.f32 %v1921, 0.0
    %v1986 = vadd.f32 %v1922, 0.0
    %v1987 = vadd.f32 %v1923, 0.0
    %v1988 = vadd.f32 %v1924, 0.0
    %v1989 = vadd.f32 %v1925, 0.0
    %v1990 = vadd.f32 %v1926, 0.0
    %v1991 = vand.u32 2147483647, %v1943
    %v1992 = vand.u32 2147483647, %v1944
    %v1993 = vand.u32 2147483647, %v1945
    %v1994 = vand.u32 2147483647, %v1946
    %v1995 = vand.u32 2147483647, %v1947
    %v1996 = vand.u32 2147483647, %v1948
    %v1997 = vand.u32 2147483647, %v1949
    %v1998 = vand.u32 2147483647, %v1950
    %v1999 = vand.u32 2147483647, %v1951
    %v2000 = vand.u32 2147483647, %v1952
    %v2001 = vand.u32 2147483647, %v1953
    %v2002 = vand.u32 2147483647, %v1954
    %v2003 = vand.u32 2147483647, %v1955
    %v2004 = vand.u32 2147483647, %v1956
    %v2005 = vand.u32 2147483647, %v1957
    %v2006 = vand.u32 2147483647, %v1958
    %v2007 = vsub.f32 0.0, %v1991
    %v2008 = vsub.f32 0.0, %v1992
    %v2009 = vsub.f32 0.0, %v1993
    %v2010 = vsub.f32 0.0, %v1994
    %v2011 = vsub.f32 0.0, %v1995
    %v2012 = vsub.f32 0.0, %v1996
    %v2013 = vsub.f32 0.0, %v1997
    %v2014 = vsub.f32 0.0, %v1998
    %v2015 = vsub.f32 0.0, %v1999
    %v2016 = vsub.f32 0.0, %v2000
    %v2017 = vsub.f32 0.0, %v2001
    %v2018 = vsub.f32 0.0, %v2002
    %v2019 = vsub.f32 0.0, %v2003
    %v2020 = vsub.f32 0.0, %v2004
    %v2021 = vsub.f32 0.0, %v2005
    %v2022 = vsub.f32 0.0, %v2006
    %v2023 = vmul.f32 %v2007, 1.442695
    %v2024 = vpow.pop %v2023
    %v2025 = vmul.f32 %v2008, 1.442695
    %v2026 = vpow.pop %v2025
    %v2027 = vmul.f32 %v2009, 1.442695
    %v2028 = vpow.pop %v2027
    %v2029 = vmul.f32 %v2010, 1.442695
    %v2030 = vpow.pop %v2029
    %v2031 = vmul.f32 %v2011, 1.442695
    %v2032 = vpow.pop %v2031
    %v2033 = vmul.f32 %v2012, 1.442695
    %v2034 = vpow.pop %v2033
    %v2035 = vmul.f32 %v2013, 1.442695
    %v2036 = vpow.pop %v2035
    %v2037 = vmul.f32 %v2014, 1.442695
    %v2038 = vpow.pop %v2037
    %v2039 = vmul.f32 %v2015, 1.442695
    %v2040 = vpow.pop %v2039
    %v2041 = vmul.f32 %v2016, 1.442695
    %v2042 = vpow.pop %v2041
    %v2043 = vmul.f32 %v2017, 1.442695
    %v2044 = vpow.pop %v2043
    %v2045 = vmul.f32 %v2018, 1.442695
    %v2046 = vpow.pop %v2045
    %v2047 = vmul.f32 %v2019, 1.442695
    %v2048 = vpow.pop %v2047
    %v2049 = vmul.f32 %v2020, 1.442695
    %v2050 = vpow.pop %v2049
    %v2051 = vmul.f32 %v2021, 1.442695
    %v2052 = vpow.pop %v2051
    %v2053 = vmul.f32 %v2022, 1.442695
    %v2054 = vpow.pop %v2053
    %v2055 = vadd.f32 %v2024, 1.0
    %v2056 = vlog2.pop %v2055
    %v2057 = vmul.f32 %v2056, 0.6931472
    %v2058 = vmul.f32 -0.5, %v2024
    %v2059 = vadd.f32 %v2058, 1.0
    %v2060 = vmul.f32 %v2059, %v2024
    %v2061 = vand.u32 2147483647, %v2024
    %vm2062 = vcmp.lt.f32.partialorder %v2061, 0.0004427343
    %v2063 = vsel %vm2062, %v2060, %v2057
    %v2064 = vadd.f32 %v2026, 1.0
    %v2065 = vlog2.pop %v2064
    %v2066 = vmul.f32 %v2065, 0.6931472
    %v2067 = vmul.f32 -0.5, %v2026
    %v2068 = vadd.f32 %v2067, 1.0
    %v2069 = vmul.f32 %v2068, %v2026
    %v2070 = vand.u32 2147483647, %v2026
    %vm2071 = vcmp.lt.f32.partialorder %v2070, 0.0004427343
    %v2072 = vsel %vm2071, %v2069, %v2066
    %v2073 = vadd.f32 %v2028, 1.0
    %v2074 = vlog2.pop %v2073
    %v2075 = vmul.f32 %v2074, 0.6931472
    %v2076 = vmul.f32 -0.5, %v2028
    %v2077 = vadd.f32 %v2076, 1.0
    %v2078 = vmul.f32 %v2077, %v2028
    %v2079 = vand.u32 2147483647, %v2028
    %vm2080 = vcmp.lt.f32.partialorder %v2079, 0.0004427343
    %v2081 = vsel %vm2080, %v2078, %v2075
    %v2082 = vadd.f32 %v2030, 1.0
    %v2083 = vlog2.pop %v2082
    %v2084 = vmul.f32 %v2083, 0.6931472
    %v2085 = vmul.f32 -0.5, %v2030
    %v2086 = vadd.f32 %v2085, 1.0
    %v2087 = vmul.f32 %v2086, %v2030
    %v2088 = vand.u32 2147483647, %v2030
    %vm2089 = vcmp.lt.f32.partialorder %v2088, 0.0004427343
    %v2090 = vsel %vm2089, %v2087, %v2084
    %v2091 = vadd.f32 %v2032, 1.0
    %v2092 = vlog2.pop %v2091
    %v2093 = vmul.f32 %v2092, 0.6931472
    %v2094 = vmul.f32 -0.5, %v2032
    %v2095 = vadd.f32 %v2094, 1.0
    %v2096 = vmul.f32 %v2095, %v2032
    %v2097 = vand.u32 2147483647, %v2032
    %vm2098 = vcmp.lt.f32.partialorder %v2097, 0.0004427343
    %v2099 = vsel %vm2098, %v2096, %v2093
    %v2100 = vadd.f32 %v2034, 1.0
    %v2101 = vlog2.pop %v2100
    %v2102 = vmul.f32 %v2101, 0.6931472
    %v2103 = vmul.f32 -0.5, %v2034
    %v2104 = vadd.f32 %v2103, 1.0
    %v2105 = vmul.f32 %v2104, %v2034
    %v2106 = vand.u32 2147483647, %v2034
    %vm2107 = vcmp.lt.f32.partialorder %v2106, 0.0004427343
    %v2108 = vsel %vm2107, %v2105, %v2102
    %v2109 = vadd.f32 %v2036, 1.0
    %v2110 = vlog2.pop %v2109
    %v2111 = vmul.f32 %v2110, 0.6931472
    %v2112 = vmul.f32 -0.5, %v2036
    %v2113 = vadd.f32 %v2112, 1.0
    %v2114 = vmul.f32 %v2113, %v2036
    %v2115 = vand.u32 2147483647, %v2036
    %vm2116 = vcmp.lt.f32.partialorder %v2115, 0.0004427343
    %v2117 = vsel %vm2116, %v2114, %v2111
    %v2118 = vadd.f32 %v2038, 1.0
    %v2119 = vlog2.pop %v2118
    %v2120 = vmul.f32 %v2119, 0.6931472
    %v2121 = vmul.f32 -0.5, %v2038
    %v2122 = vadd.f32 %v2121, 1.0
    %v2123 = vmul.f32 %v2122, %v2038
    %v2124 = vand.u32 2147483647, %v2038
    %vm2125 = vcmp.lt.f32.partialorder %v2124, 0.0004427343
    %v2126 = vsel %vm2125, %v2123, %v2120
    %v2127 = vadd.f32 %v2040, 1.0
    %v2128 = vlog2.pop %v2127
    %v2129 = vmul.f32 %v2128, 0.6931472
    %v2130 = vmul.f32 -0.5, %v2040
    %v2131 = vadd.f32 %v2130, 1.0
    %v2132 = vmul.f32 %v2131, %v2040
    %v2133 = vand.u32 2147483647, %v2040
    %vm2134 = vcmp.lt.f32.partialorder %v2133, 0.0004427343
    %v2135 = vsel %vm2134, %v2132, %v2129
    %v2136 = vadd.f32 %v2042, 1.0
    %v2137 = vlog2.pop %v2136
    %v2138 = vmul.f32 %v2137, 0.6931472
    %v2139 = vmul.f32 -0.5, %v2042
    %v2140 = vadd.f32 %v2139, 1.0
    %v2141 = vmul.f32 %v2140, %v2042
    %v2142 = vand.u32 2147483647, %v2042
    %vm2143 = vcmp.lt.f32.partialorder %v2142, 0.0004427343
    %v2144 = vsel %vm2143, %v2141, %v2138
    %v2145 = vadd.f32 %v2044, 1.0
    %v2146 = vlog2.pop %v2145
    %v2147 = vmul.f32 %v2146, 0.6931472
    %v2148 = vmul.f32 -0.5, %v2044
    %v2149 = vadd.f32 %v2148, 1.0
    %v2150 = vmul.f32 %v2149, %v2044
    %v2151 = vand.u32 2147483647, %v2044
    %vm2152 = vcmp.lt.f32.partialorder %v2151, 0.0004427343
    %v2153 = vsel %vm2152, %v2150, %v2147
    %v2154 = vadd.f32 %v2046, 1.0
    %v2155 = vlog2.pop %v2154
    %v2156 = vmul.f32 %v2155, 0.6931472
    %v2157 = vmul.f32 -0.5, %v2046
    %v2158 = vadd.f32 %v2157, 1.0
    %v2159 = vmul.f32 %v2158, %v2046
    %v2160 = vand.u32 2147483647, %v2046
    %vm2161 = vcmp.lt.f32.partialorder %v2160, 0.0004427343
    %v2162 = vsel %vm2161, %v2159, %v2156
    %v2163 = vadd.f32 %v2048, 1.0
    %v2164 = vlog2.pop %v2163
    %v2165 = vmul.f32 %v2164, 0.6931472
    %v2166 = vmul.f32 -0.5, %v2048
    %v2167 = vadd.f32 %v2166, 1.0
    %v2168 = vmul.f32 %v2167, %v2048
    %v2169 = vand.u32 2147483647, %v2048
    %vm2170 = vcmp.lt.f32.partialorder %v2169, 0.0004427343
    %v2171 = vsel %vm2170, %v2168, %v2165
    %v2172 = vadd.f32 %v2050, 1.0
    %v2173 = vlog2.pop %v2172
    %v2174 = vmul.f32 %v2173, 0.6931472
    %v2175 = vmul.f32 -0.5, %v2050
    %v2176 = vadd.f32 %v2175, 1.0
    %v2177 = vmul.f32 %v2176, %v2050
    %v2178 = vand.u32 2147483647, %v2050
    %vm2179 = vcmp.lt.f32.partialorder %v2178, 0.0004427343
    %v2180 = vsel %vm2179, %v2177, %v2174
    %v2181 = vadd.f32 %v2052, 1.0
    %v2182 = vlog2.pop %v2181
    %v2183 = vmul.f32 %v2182, 0.6931472
    %v2184 = vmul.f32 -0.5, %v2052
    %v2185 = vadd.f32 %v2184, 1.0
    %v2186 = vmul.f32 %v2185, %v2052
    %v2187 = vand.u32 2147483647, %v2052
    %vm2188 = vcmp.lt.f32.partialorder %v2187, 0.0004427343
    %v2189 = vsel %vm2188, %v2186, %v2183
    %v2190 = vadd.f32 %v2054, 1.0
    %v2191 = vlog2.pop %v2190
    %v2192 = vmul.f32 %v2191, 0.6931472
    %v2193 = vmul.f32 -0.5, %v2054
    %v2194 = vadd.f32 %v2193, 1.0
    %v2195 = vmul.f32 %v2194, %v2054
    %v2196 = vand.u32 2147483647, %v2054
    %vm2197 = vcmp.lt.f32.partialorder %v2196, 0.0004427343
    %v2198 = vsel %vm2197, %v2195, %v2192
    %v2199 = vadd.f32 %v1927, %v2063
    %v2200 = vadd.f32 %v1928, %v2072
    %v2201 = vadd.f32 %v1929, %v2081
    %v2202 = vadd.f32 %v1930, %v2090
    %v2203 = vadd.f32 %v1931, %v2099
    %v2204 = vadd.f32 %v1932, %v2108
    %v2205 = vadd.f32 %v1933, %v2117
    %v2206 = vadd.f32 %v1934, %v2126
    %v2207 = vadd.f32 %v1935, %v2135
    %v2208 = vadd.f32 %v1936, %v2144
    %v2209 = vadd.f32 %v1937, %v2153
    %v2210 = vadd.f32 %v1938, %v2162
    %v2211 = vadd.f32 %v1939, %v2171
    %v2212 = vadd.f32 %v1940, %v2180
    %v2213 = vadd.f32 %v1941, %v2189
    %v2214 = vadd.f32 %v1942, %v2198
    %v2215 = vsel %vm1959, %v1975, %v2199
    %v2216 = vsel %vm1960, %v1976, %v2200
    %v2217 = vsel %vm1961, %v1977, %v2201
    %v2218 = vsel %vm1962, %v1978, %v2202
    %v2219 = vsel %vm1963, %v1979, %v2203
    %v2220 = vsel %vm1964, %v1980, %v2204
    %v2221 = vsel %vm1965, %v1981, %v2205
    %v2222 = vsel %vm1966, %v1982, %v2206
    %v2223 = vsel %vm1967, %v1983, %v2207
    %v2224 = vsel %vm1968, %v1984, %v2208
    %v2225 = vsel %vm1969, %v1985, %v2209
    %v2226 = vsel %vm1970, %v1986, %v2210
    %v2227 = vsel %vm1971, %v1987, %v2211
    %v2228 = vsel %vm1972, %v1988, %v2212
    %v2229 = vsel %vm1973, %v1989, %v2213
    %v2230 = vsel %vm1974, %v1990, %v2214
    %vm2231 = vcmask 7168
    %2232 = vst.msk [vmem:[%s8] sm:$0xff] %vm2231, %v2215
    %2233 = vst.msk [vmem:[%s8 + $0x8] sm:$0xff] %vm2231, %v2216
    %2234 = vst.msk [vmem:[%s8 + $0x10] sm:$0xff] %vm2231, %v2217
    %2235 = vst.msk [vmem:[%s8 + $0x18] sm:$0xff] %vm2231, %v2218
    %2236 = vst.msk [vmem:[%s8 + $0x20] sm:$0xff] %vm2231, %v2219
    %2237 = vst.msk [vmem:[%s8 + $0x28] sm:$0xff] %vm2231, %v2220
    %2238 = vst.msk [vmem:[%s8 + $0x30] sm:$0xff] %vm2231, %v2221
    %2239 = vst.msk [vmem:[%s8 + $0x38] sm:$0xff] %vm2231, %v2222
    %2240 = vst.msk [vmem:[%s8 + $0x40] sm:$0xff] %vm2231, %v2223
    %2241 = vst.msk [vmem:[%s8 + $0x48] sm:$0xff] %vm2231, %v2224
    %2242 = vst.msk [vmem:[%s8 + $0x50] sm:$0xff] %vm2231, %v2225
    %2243 = vst.msk [vmem:[%s8 + $0x58] sm:$0xff] %vm2231, %v2226
    %2244 = vst.msk [vmem:[%s8 + $0x60] sm:$0xff] %vm2231, %v2227
    %2245 = vst.msk [vmem:[%s8 + $0x68] sm:$0xff] %vm2231, %v2228
    %2246 = vst.msk [vmem:[%s8 + $0x70] sm:$0xff] %vm2231, %v2229
    %2247 = vst.msk [vmem:[%s8 + $0x78] sm:$0xff] %vm2231, %v2230
  $region41: #{tpu_custom_call.1} parent=0 // pred_fallthru
    _
  // Predicated region
  $region42: #{tpu_custom_call.1} parent=0 // pred_check
    _
  $region43: #{tpu_custom_call.1} parent=0 // pred_check_branch
    %2249 = sbr.rel (0) target = $region45
  $region44: #{tpu_custom_call.1} parent=0 // pred_region
    _
  $region45: #{tpu_custom_call.1} parent=0 // pred_fallthru
    _
  // Predicated region
  $region46: #{tpu_custom_call.1} parent=0 // pred_check
    _
  $region47: #{tpu_custom_call.1} parent=0 // pred_check_branch
    %2251 = sbr.rel (0) target = $region49
  $region48: #{tpu_custom_call.1} parent=0 // pred_region
    _
  $region49: #{tpu_custom_call.1} parent=0 // pred_fallthru
    _

</llo_original>
